<compile_context>
chip_gen: v7x
topology: tpu7x:2x2x1
jax: 0.10.0
libtpu: 0.0.40
codegen_flags: <defaults>
</compile_context>

<pallas_src>
import functools

import jax
import jax.numpy as jnp
from jax.experimental import pallas as pl
from jax.experimental.pallas import tpu as pltpu

EPS = 1e-5


# ----------------------------------------------------------------------------
# VMEM budgeting (generation-aware: v5e/v6e 128 MiB, v7x 64 MiB per core).
# ----------------------------------------------------------------------------
def _vmem_capacity_bytes():
    try:
        return int(pltpu.get_tpu_info().vmem_capacity_bytes)
    except Exception:
        return 64 * 1024 * 1024          # conservative fallback (v7x per-core)


def _block_budget_bytes(vmem_cap):
    # Single-copy (x tile + out tile + f32 temps) target per grid step;
    # double-buffering, the weight and headroom are added when the scoped
    # limit is requested below.
    return max(4 * 1024 * 1024, min(vmem_cap // 8, 12 * 1024 * 1024))


def _vmem_limit_bytes(x_blk, out_blk, w_bytes, f32_tmp, vmem_cap):
    # 2x double-buffered x/out blocks + 2x the constant-index weight block +
    # f32 matmul/LayerNorm temporaries + Mosaic-internal scratch headroom.
    need = 2 * (x_blk + out_blk) + 2 * w_bytes + f32_tmp + 4 * 1024 * 1024
    return int(min(max(need, 32 * 1024 * 1024), (vmem_cap * 3) // 4))


def _pick_tile_h(B, H, W, dim, io_itemsize, block_budget):
    """Largest row tile TH whose single-copy VMEM footprint fits the budget.

    Keeps >= 2 grid steps at batch=1 (both v7x TensorCores busy and the DMA
    pipeline always overlapped), prefers lane-aligned flattened pixel counts,
    and never silently exceeds the budget (pl.cdiv handles any row tail).
    """
    # Per image row: x slab dim*W + out slab 2*dim*W (io dtype) + ~3 f32 copies
    # of the out slab for the matmul / LayerNorm / store-staging temporaries.
    row_bytes = 3 * dim * W * io_itemsize + 6 * dim * W * 4
    sub = {1: 16, 2: 8}.get(io_itemsize, 4)      # out-block sublane dim is 2*TH
    max_th = max(1, block_budget // row_bytes)
    if B == 1:
        max_th = min(max_th, max(sub, H // 2))   # keep >= 2 grid steps (v7x)
    if max_th >= H:
        return H
    for th in range(min(max_th, H - 1), 0, -1):  # lane-aligned pixel tiles
        if th % sub == 0 and (th * W) % 128 == 0:
            return th
    for th in range(min(max_th, H - 1), 0, -1):  # sublane-aligned fallback
        if th % sub == 0:
            return th
    return max(1, min(max_th, H - 1))


# ----------------------------------------------------------------------------
# In-kernel LayerNorm over the 4 (p1, p2) channel groups of size c = dim // 2.
# ----------------------------------------------------------------------------
def _group_layernorm(y, gamma, beta, c):
    gamma = gamma.astype(jnp.float32)    # (1, c)
    beta = beta.astype(jnp.float32)      # (1, c)
    groups = []
    for p in range(4):
        yp = y[:, p * c:(p + 1) * c]
        mean = jnp.mean(yp, axis=-1, keepdims=True)
        var = jnp.mean(jnp.square(yp - mean), axis=-1, keepdims=True)  # biased
        groups.append((yp - mean) * jax.lax.rsqrt(var + EPS) * gamma + beta)
    return groups


# ----------------------------------------------------------------------------
# Fused kernels: NCHW read + expand matmul + group LayerNorm + pixel shuffle.
# The matmul contracts over the channel axis of both operands, so the NCHW ->
# NHWC transpose never touches HBM.  (At very deep stages, if Mosaic inserts a
# vxpose for this transposed-LHS orientation and XLU becomes the binding slot,
# re-orient to (TP, dim) rows for those stages.)
# ----------------------------------------------------------------------------
def _fused_kernel_merged(x_ref, w_ref, g_ref, b_ref, o_ref, *, TH, W, c):
    """dim < 128 path: merged (2*W*c)-lane output slab, single lane-dense store."""
    # x_ref: (1, dim, TP), TP = TH*W pixels; w_ref: (dim, 4c); o_ref: (1, 2*TH, 2*W*c)
    y = jax.lax.dot_general(x_ref[0], w_ref[...], (((0,), (0,)), ((), ())),
                            preferred_element_type=jnp.float32)        # (TP, 4c)
    g0, g1, g2, g3 = _group_layernorm(y, g_ref[...], b_ref[...], c)
    yn = jnp.concatenate([g0, g1, g2, g3], axis=-1)                    # (TP, 4c)
    yn3 = yn.reshape(TH, W, 4 * c)
    top = yn3[:, :, :2 * c].reshape(TH, 2 * W * c)                     # p1 = 0
    bot = yn3[:, :, 2 * c:].reshape(TH, 2 * W * c)                     # p1 = 1
    out = jnp.concatenate([top, bot], axis=-1).reshape(2 * TH, 2 * W * c)
    o_ref[0] = out.astype(o_ref.dtype)                 # one lane-dense store


def _fused_kernel_grouped(x_ref, w_ref, g_ref, b_ref, o_ref, *, TH, W, c):
    """dim >= 128 path: (B, 2H, W, 2c) output, no W->lane merge relayout."""
    # o_ref: (1, 2*TH, W, 2*c); lane width 2c >= 128 stays dense.
    y = jax.lax.dot_general(x_ref[0], w_ref[...], (((0,), (0,)), ((), ())),
                            preferred_element_type=jnp.float32)        # (TP, 4c)
    g0, g1, g2, g3 = _group_layernorm(y, g_ref[...], b_ref[...], c)
    top = jnp.concatenate([g0, g1], axis=-1).reshape(TH, W, 2 * c)     # p1 = 0
    bot = jnp.concatenate([g2, g3], axis=-1).reshape(TH, W, 2 * c)     # p1 = 1
    out = jnp.stack([top, bot], axis=1).reshape(2 * TH, W, 2 * c)      # row 2t+p1
    o_ref[0] = out.astype(o_ref.dtype)                 # one lane-dense store


# ----------------------------------------------------------------------------
# Wrapper.
# ----------------------------------------------------------------------------
@functools.partial(jax.jit, static_argnames=("tile_h",))
def _patch_expand_call(x_nchw, w_expand, gamma, beta, tile_h=None):
    B, dim, H, W = x_nchw.shape
    c = dim // 2
    itemsize = x_nchw.dtype.itemsize

    vmem_cap = _vmem_capacity_bytes()
    if tile_h is None:
        TH = _pick_tile_h(B, H, W, dim, itemsize, _block_budget_bytes(vmem_cap))
    else:
        TH = max(1, min(int(tile_h), H))
    TP = TH * W

    x2 = x_nchw.reshape(B, dim, H * W)       # free reshape (no HBM pass)
    w_t = jnp.transpose(w_expand)            # (dim, 2*dim), tiny
    g2 = gamma.reshape(1, c)
    b2 = beta.reshape(1, c)

    grid = (B, pl.cdiv(H, TH))

    x_blk = dim * TP * itemsize
    out_blk = 2 * dim * TP * itemsize
    w_bytes = dim * 2 * dim * w_expand.dtype.itemsize
    f32_tmp = 3 * (2 * dim * TP) * 4
    vmem_limit = _vmem_limit_bytes(x_blk, out_blk, w_bytes, f32_tmp, vmem_cap)

    cost = pl.CostEstimate(
        flops=4 * B * H * W * dim * dim,
        transcendentals=4 * B * H * W,
        bytes_accessed=3 * B * dim * H * W * itemsize + w_bytes)

    in_specs = [
        pl.BlockSpec((1, dim, TP), lambda bi, hi: (bi, 0, hi)),
        # Constant-index operands are copied to VMEM once (no per-step DMA);
        # their second pipeline buffer is charged to vmem_limit above instead
        # of relying on pipeline_mode=pl.Buffered(1), for toolchain portability.
        pl.BlockSpec((dim, 2 * dim), lambda bi, hi: (0, 0)),
        pl.BlockSpec((1, c), lambda bi, hi: (0, 0)),
        pl.BlockSpec((1, c), lambda bi, hi: (0, 0)),
    ]
    compiler_params = pltpu.CompilerParams(
        dimension_semantics=("parallel", "parallel"),
        vmem_limit_bytes=vmem_limit)

    if 2 * c >= 128:
        # (B, 2H, W, 2c) flattens row-major to exactly the (B, 4HW, c) target.
        out = pl.pallas_call(
            functools.partial(_fused_kernel_grouped, TH=TH, W=W, c=c),
            out_shape=jax.ShapeDtypeStruct((B, 2 * H, W, 2 * c), x_nchw.dtype),
            grid_spec=pltpu.PrefetchScalarGridSpec(
                num_scalar_prefetch=0, grid=grid, in_specs=in_specs,
                out_specs=pl.BlockSpec((1, 2 * TH, W, 2 * c),
                                       lambda bi, hi: (bi, hi, 0, 0))),
            compiler_params=compiler_params,
            cost_estimate=cost,
        )(x2, w_t, g2, b2)
    else:
        # 2c < 128: keep the merged lane-dense (2*W*c)-wide slab.
        out = pl.pallas_call(
            functools.partial(_fused_kernel_merged, TH=TH, W=W, c=c),
            out_shape=jax.ShapeDtypeStruct((B, 2 * H, 2 * W * c), x_nchw.dtype),
            grid_spec=pltpu.PrefetchScalarGridSpec(
                num_scalar_prefetch=0, grid=grid, in_specs=in_specs,
                out_specs=pl.BlockSpec((1, 2 * TH, 2 * W * c),
                                       lambda bi, hi: (bi, hi, 0))),
            compiler_params=compiler_params,
            cost_estimate=cost,
        )(x2, w_t, g2, b2)

    return out.reshape(B, 4 * H * W, c)      # row-major, free reshape


def patch_expand(x_nchw, w_expand, gamma, beta, tile_h=None):
    """PatchExpand forward: NCHW input -> (B, 4*H*W, dim//2)."""
    return _patch_expand_call(x_nchw, w_expand, gamma, beta, tile_h=tile_h)


# ----------------------------------------------------------------------------
# Pure-JAX reference mirroring the PyTorch forward exactly.
# ----------------------------------------------------------------------------
def patch_expand_reference(x_nchw, w_expand, gamma, beta):
    B, C, H, W = x_nchw.shape
    dim = C
    c_out = dim // 2
    x = jnp.transpose(x_nchw, (0, 2, 3, 1))                    # (B, H, W, dim)
    x = jnp.einsum("bhwc,oc->bhwo", x, w_expand)               # Linear, no bias
    x = x.reshape(B, H, W, 2, 2, c_out)                        # (p1, p2, c)
    x = jnp.transpose(x, (0, 1, 3, 2, 4, 5)).reshape(B, 2 * H, 2 * W, c_out)
    x = x.reshape(B, 4 * H * W, c_out)
    mean = jnp.mean(x, axis=-1, keepdims=True)
    var = jnp.mean(jnp.square(x - mean), axis=-1, keepdims=True)
    x = (x - mean) * jax.lax.rsqrt(var + EPS)
    return x * gamma.reshape(1, 1, c_out) + beta.reshape(1, 1, c_out)


if __name__ == "__main__":
    key = jax.random.PRNGKey(0)
    k_x, k_w, k_g, k_b = jax.random.split(key, 4)

    def make_inputs(B, dim, H, W, dtype=jnp.float32):
        x = jax.random.normal(k_x, (B, dim, H, W), dtype=jnp.float32)
        w = jax.random.normal(k_w, (2 * dim, dim), dtype=jnp.float32) * 0.05
        g = 1.0 + 0.1 * jax.random.normal(k_g, (dim // 2,), dtype=jnp.float32)
        b = 0.1 * jax.random.normal(k_b, (dim // 2,), dtype=jnp.float32)
        return x.astype(dtype), w.astype(dtype), g, b

    # 1) dim < 128 (merged lane-dense output path), f32.
    x, w, g, b = make_inputs(2, 64, 8, 8)
    out = jax.block_until_ready(patch_expand(x, w, g, b))
    ref = patch_expand_reference(x, w, g, b)
    assert out.shape == (2, 4 * 8 * 8, 32), out.shape
    assert jnp.allclose(out, ref, rtol=2e-4, atol=2e-4), \
        float(jnp.max(jnp.abs(out - ref)))

    # 2) dim >= 128 ((B, 2H, W, 2c) output path, lane width 2c = 128), f32.
    x, w, g, b = make_inputs(2, 128, 8, 8)
    out = jax.block_until_ready(patch_expand(x, w, g, b))
    ref = patch_expand_reference(x, w, g, b)
    assert out.shape == (2, 4 * 8 * 8, 64), out.shape
    # headroom for MXU default-precision differences at K = 128
    assert jnp.allclose(out, ref, rtol=2e-3, atol=2e-3), \
        float(jnp.max(jnp.abs(out - ref)))

    # 3) non-dividing row tile (tail-block masking) + batch-1 grid, f32.
    x, w, g, b = make_inputs(1, 64, 48, 16)
    out = jax.block_until_ready(patch_expand(x, w, g, b, tile_h=32))
    ref = patch_expand_reference(x, w, g, b)
    assert out.shape == (1, 4 * 48 * 16, 32), out.shape
    assert jnp.allclose(out, ref, rtol=2e-4, atol=2e-4), \
        float(jnp.max(jnp.abs(out - ref)))

    # 4) bf16 I/O smoke test (LayerNorm math stays f32 inside the kernel).
    x, w, g, b = make_inputs(2, 64, 8, 8, dtype=jnp.bfloat16)
    out = jax.block_until_ready(patch_expand(x, w, g, b))
    ref = patch_expand_reference(x.astype(jnp.float32), w.astype(jnp.float32), g, b)
    assert out.shape == (2, 4 * 8 * 8, 32), out.shape
    assert jnp.allclose(out.astype(jnp.float32), ref, rtol=5e-2, atol=1e-1), \
        float(jnp.max(jnp.abs(out.astype(jnp.float32) - ref)))

    print("KERNEL_OK")
</pallas_src>

<mosaic_0001>
module attributes {stable_mosaic.version = 11 : i64} {
  func.func @_fused_kernel_merged(%arg0: i32, %arg1: i32, %arg2: memref<1x64x64xf32, #tpu.memory_space<vmem>>, %arg3: memref<64x128xf32, #tpu.memory_space<vmem>>, %arg4: memref<1x32xf32, #tpu.memory_space<vmem>>, %arg5: memref<1x32xf32, #tpu.memory_space<vmem>>, %arg6: memref<1x16x512xf32, #tpu.memory_space<vmem>>) attributes {dimension_semantics = [#tpu.dimension_semantics<parallel>, #tpu.dimension_semantics<parallel>], iteration_bounds = array<i64: 2, 1>, scalar_prefetch = 0 : i64, scratch_operands = 0 : i64, tpu.core_type = #tpu.core_type<tc>, window_params = [{transform_indices = @transform_0, window_bounds = array<i64: 1, 64, 64>}, {pipeline_mode = #tpu.pipeline_mode<synchronous>, transform_indices = @transform_1, window_bounds = array<i64: 64, 128>}, {pipeline_mode = #tpu.pipeline_mode<synchronous>, transform_indices = @transform_2, window_bounds = array<i64: 1, 32>}, {pipeline_mode = #tpu.pipeline_mode<synchronous>, transform_indices = @transform_3, window_bounds = array<i64: 1, 32>}, {transform_indices = @transform_4, window_bounds = array<i64: 1, 16, 512>}]} {
    %c0 = arith.constant 0 : index
    %c0_0 = arith.constant 0 : index
    %c0_1 = arith.constant 0 : index
    %0 = vector.load %arg2[%c0, %c0_0, %c0_1] : memref<1x64x64xf32, #tpu.memory_space<vmem>>, vector<1x64x64xf32>
    %1 = vector.shape_cast %0 : vector<1x64x64xf32> to vector<64x64xf32>
    %c0_2 = arith.constant 0 : index
    %c0_3 = arith.constant 0 : index
    %2 = vector.load %arg3[%c0_2, %c0_3] : memref<64x128xf32, #tpu.memory_space<vmem>>, vector<64x128xf32>
    %cst = arith.constant dense<0.000000e+00> : vector<64x128xf32>
    %3 = tpu.matmul %1, %2, %cst {dimension_numbers = #tpu.dot_dimension_numbers<[0], [0], [1], [1], [0, 1, 1, 1], [], []>} : vector<64x64xf32>, vector<64x128xf32>, vector<64x128xf32> -> vector<64x128xf32>
    %c0_4 = arith.constant 0 : index
    %c0_5 = arith.constant 0 : index
    %4 = vector.load %arg4[%c0_4, %c0_5] : memref<1x32xf32, #tpu.memory_space<vmem>>, vector<1x32xf32>
    %c0_6 = arith.constant 0 : index
    %c0_7 = arith.constant 0 : index
    %5 = vector.load %arg5[%c0_6, %c0_7] : memref<1x32xf32, #tpu.memory_space<vmem>>, vector<1x32xf32>
    %6 = vector.extract_strided_slice %3 {offsets = [0, 0], sizes = [64, 32], strides = [1, 1]} : vector<64x128xf32> to vector<64x32xf32>
    %cst_8 = arith.constant dense<0.000000e+00> : vector<64xf32>
    %7 = vector.multi_reduction <add>, %6, %cst_8 [1] : vector<64x32xf32> to vector<64xf32>
    %8 = vector.shape_cast %7 : vector<64xf32> to vector<64x1xf32>
    %cst_9 = arith.constant 3.200000e+01 : f32
    %9 = vector.broadcast %cst_9 : f32 to vector<64x1xf32>
    %10 = arith.divf %8, %9 : vector<64x1xf32>
    %11 = vector.broadcast %10 : vector<64x1xf32> to vector<64x32xf32>
    %12 = arith.subf %6, %11 : vector<64x32xf32>
    %13 = arith.mulf %12, %12 : vector<64x32xf32>
    %cst_10 = arith.constant dense<0.000000e+00> : vector<64xf32>
    %14 = vector.multi_reduction <add>, %13, %cst_10 [1] : vector<64x32xf32> to vector<64xf32>
    %15 = vector.shape_cast %14 : vector<64xf32> to vector<64x1xf32>
    %cst_11 = arith.constant 3.200000e+01 : f32
    %16 = vector.broadcast %cst_11 : f32 to vector<64x1xf32>
    %17 = arith.divf %15, %16 : vector<64x1xf32>
    %18 = vector.broadcast %10 : vector<64x1xf32> to vector<64x32xf32>
    %19 = arith.subf %6, %18 : vector<64x32xf32>
    %cst_12 = arith.constant 9.99999974E-6 : f32
    %20 = vector.broadcast %cst_12 : f32 to vector<64x1xf32>
    %21 = arith.addf %17, %20 : vector<64x1xf32>
    %22 = math.rsqrt %21 : vector<64x1xf32>
    %23 = vector.broadcast %22 : vector<64x1xf32> to vector<64x32xf32>
    %24 = arith.mulf %19, %23 : vector<64x32xf32>
    %25 = vector.broadcast %4 : vector<1x32xf32> to vector<64x32xf32>
    %26 = arith.mulf %24, %25 : vector<64x32xf32>
    %27 = vector.broadcast %5 : vector<1x32xf32> to vector<64x32xf32>
    %28 = arith.addf %26, %27 : vector<64x32xf32>
    %29 = vector.extract_strided_slice %3 {offsets = [0, 32], sizes = [64, 32], strides = [1, 1]} : vector<64x128xf32> to vector<64x32xf32>
    %cst_13 = arith.constant dense<0.000000e+00> : vector<64xf32>
    %30 = vector.multi_reduction <add>, %29, %cst_13 [1] : vector<64x32xf32> to vector<64xf32>
    %31 = vector.shape_cast %30 : vector<64xf32> to vector<64x1xf32>
    %cst_14 = arith.constant 3.200000e+01 : f32
    %32 = vector.broadcast %cst_14 : f32 to vector<64x1xf32>
    %33 = arith.divf %31, %32 : vector<64x1xf32>
    %34 = vector.broadcast %33 : vector<64x1xf32> to vector<64x32xf32>
    %35 = arith.subf %29, %34 : vector<64x32xf32>
    %36 = arith.mulf %35, %35 : vector<64x32xf32>
    %cst_15 = arith.constant dense<0.000000e+00> : vector<64xf32>
    %37 = vector.multi_reduction <add>, %36, %cst_15 [1] : vector<64x32xf32> to vector<64xf32>
    %38 = vector.shape_cast %37 : vector<64xf32> to vector<64x1xf32>
    %cst_16 = arith.constant 3.200000e+01 : f32
    %39 = vector.broadcast %cst_16 : f32 to vector<64x1xf32>
    %40 = arith.divf %38, %39 : vector<64x1xf32>
    %41 = vector.broadcast %33 : vector<64x1xf32> to vector<64x32xf32>
    %42 = arith.subf %29, %41 : vector<64x32xf32>
    %cst_17 = arith.constant 9.99999974E-6 : f32
    %43 = vector.broadcast %cst_17 : f32 to vector<64x1xf32>
    %44 = arith.addf %40, %43 : vector<64x1xf32>
    %45 = math.rsqrt %44 : vector<64x1xf32>
    %46 = vector.broadcast %45 : vector<64x1xf32> to vector<64x32xf32>
    %47 = arith.mulf %42, %46 : vector<64x32xf32>
    %48 = vector.broadcast %4 : vector<1x32xf32> to vector<64x32xf32>
    %49 = arith.mulf %47, %48 : vector<64x32xf32>
    %50 = vector.broadcast %5 : vector<1x32xf32> to vector<64x32xf32>
    %51 = arith.addf %49, %50 : vector<64x32xf32>
    %52 = vector.extract_strided_slice %3 {offsets = [0, 64], sizes = [64, 32], strides = [1, 1]} : vector<64x128xf32> to vector<64x32xf32>
    %cst_18 = arith.constant dense<0.000000e+00> : vector<64xf32>
    %53 = vector.multi_reduction <add>, %52, %cst_18 [1] : vector<64x32xf32> to vector<64xf32>
    %54 = vector.shape_cast %53 : vector<64xf32> to vector<64x1xf32>
    %cst_19 = arith.constant 3.200000e+01 : f32
    %55 = vector.broadcast %cst_19 : f32 to vector<64x1xf32>
    %56 = arith.divf %54, %55 : vector<64x1xf32>
    %57 = vector.broadcast %56 : vector<64x1xf32> to vector<64x32xf32>
    %58 = arith.subf %52, %57 : vector<64x32xf32>
    %59 = arith.mulf %58, %58 : vector<64x32xf32>
    %cst_20 = arith.constant dense<0.000000e+00> : vector<64xf32>
    %60 = vector.multi_reduction <add>, %59, %cst_20 [1] : vector<64x32xf32> to vector<64xf32>
    %61 = vector.shape_cast %60 : vector<64xf32> to vector<64x1xf32>
    %cst_21 = arith.constant 3.200000e+01 : f32
    %62 = vector.broadcast %cst_21 : f32 to vector<64x1xf32>
    %63 = arith.divf %61, %62 : vector<64x1xf32>
    %64 = vector.broadcast %56 : vector<64x1xf32> to vector<64x32xf32>
    %65 = arith.subf %52, %64 : vector<64x32xf32>
    %cst_22 = arith.constant 9.99999974E-6 : f32
    %66 = vector.broadcast %cst_22 : f32 to vector<64x1xf32>
    %67 = arith.addf %63, %66 : vector<64x1xf32>
    %68 = math.rsqrt %67 : vector<64x1xf32>
    %69 = vector.broadcast %68 : vector<64x1xf32> to vector<64x32xf32>
    %70 = arith.mulf %65, %69 : vector<64x32xf32>
    %71 = vector.broadcast %4 : vector<1x32xf32> to vector<64x32xf32>
    %72 = arith.mulf %70, %71 : vector<64x32xf32>
    %73 = vector.broadcast %5 : vector<1x32xf32> to vector<64x32xf32>
    %74 = arith.addf %72, %73 : vector<64x32xf32>
    %75 = vector.extract_strided_slice %3 {offsets = [0, 96], sizes = [64, 32], strides = [1, 1]} : vector<64x128xf32> to vector<64x32xf32>
    %cst_23 = arith.constant dense<0.000000e+00> : vector<64xf32>
    %76 = vector.multi_reduction <add>, %75, %cst_23 [1] : vector<64x32xf32> to vector<64xf32>
    %77 = vector.shape_cast %76 : vector<64xf32> to vector<64x1xf32>
    %cst_24 = arith.constant 3.200000e+01 : f32
    %78 = vector.broadcast %cst_24 : f32 to vector<64x1xf32>
    %79 = arith.divf %77, %78 : vector<64x1xf32>
    %80 = vector.broadcast %79 : vector<64x1xf32> to vector<64x32xf32>
    %81 = arith.subf %75, %80 : vector<64x32xf32>
    %82 = arith.mulf %81, %81 : vector<64x32xf32>
    %cst_25 = arith.constant dense<0.000000e+00> : vector<64xf32>
    %83 = vector.multi_reduction <add>, %82, %cst_25 [1] : vector<64x32xf32> to vector<64xf32>
    %84 = vector.shape_cast %83 : vector<64xf32> to vector<64x1xf32>
    %cst_26 = arith.constant 3.200000e+01 : f32
    %85 = vector.broadcast %cst_26 : f32 to vector<64x1xf32>
    %86 = arith.divf %84, %85 : vector<64x1xf32>
    %87 = vector.broadcast %79 : vector<64x1xf32> to vector<64x32xf32>
    %88 = arith.subf %75, %87 : vector<64x32xf32>
    %cst_27 = arith.constant 9.99999974E-6 : f32
    %89 = vector.broadcast %cst_27 : f32 to vector<64x1xf32>
    %90 = arith.addf %86, %89 : vector<64x1xf32>
    %91 = math.rsqrt %90 : vector<64x1xf32>
    %92 = vector.broadcast %91 : vector<64x1xf32> to vector<64x32xf32>
    %93 = arith.mulf %88, %92 : vector<64x32xf32>
    %94 = vector.broadcast %4 : vector<1x32xf32> to vector<64x32xf32>
    %95 = arith.mulf %93, %94 : vector<64x32xf32>
    %96 = vector.broadcast %5 : vector<1x32xf32> to vector<64x32xf32>
    %97 = arith.addf %95, %96 : vector<64x32xf32>
    %98 = tpu.concatenate %28, %51, %74, %97 in 1 : vector<64x32xf32>, vector<64x32xf32>, vector<64x32xf32>, vector<64x32xf32> -> vector<64x128xf32>
    %99 = vector.shape_cast %98 : vector<64x128xf32> to vector<8x8x128xf32>
    %100 = vector.extract_strided_slice %99 {offsets = [0, 0, 0], sizes = [8, 8, 64], strides = [1, 1, 1]} : vector<8x8x128xf32> to vector<8x8x64xf32>
    %101 = vector.shape_cast %100 : vector<8x8x64xf32> to vector<8x512xf32>
    %102 = vector.extract_strided_slice %99 {offsets = [0, 0, 64], sizes = [8, 8, 64], strides = [1, 1, 1]} : vector<8x8x128xf32> to vector<8x8x64xf32>
    %103 = vector.shape_cast %102 : vector<8x8x64xf32> to vector<8x512xf32>
    %104 = tpu.concatenate %101, %103 in 1 : vector<8x512xf32>, vector<8x512xf32> -> vector<8x1024xf32>
    %105 = vector.shape_cast %104 : vector<8x1024xf32> to vector<16x512xf32>
    %c0_28 = arith.constant 0 : index
    %c0_29 = arith.constant 0 : index
    %c0_30 = arith.constant 0 : index
    %106 = vector.load %arg6[%c0_28, %c0_29, %c0_30] : memref<1x16x512xf32, #tpu.memory_space<vmem>>, vector<1x16x512xf32>
    %107 = vector.shape_cast %106 : vector<1x16x512xf32> to vector<16x512xf32>
    %108 = vector.shape_cast %105 : vector<16x512xf32> to vector<1x16x512xf32>
    tpu.vector_store %arg6[%c0_28, %c0_29, %c0_30], %108 {strides = array<i32>} : memref<1x16x512xf32, #tpu.memory_space<vmem>>, vector<1x16x512xf32>,
    return
  }
  func.func @transform_0(%arg0: i32, %arg1: i32) -> (i32, i32, i32) {
    %c0_i32 = arith.constant 0 : i32
    %c0_i32_0 = arith.constant 0 : i32
    return %arg0, %c0_i32, %arg1 : i32, i32, i32
  }
  func.func @transform_1(%arg0: i32, %arg1: i32) -> (i32, i32) {
    %c0_i32 = arith.constant 0 : i32
    %c0_i32_0 = arith.constant 0 : i32
    %c0_i32_1 = arith.constant 0 : i32
    return %c0_i32, %c0_i32_0 : i32, i32
  }
  func.func @transform_2(%arg0: i32, %arg1: i32) -> (i32, i32) {
    %c0_i32 = arith.constant 0 : i32
    %c0_i32_0 = arith.constant 0 : i32
    %c0_i32_1 = arith.constant 0 : i32
    return %c0_i32, %c0_i32_0 : i32, i32
  }
  func.func @transform_3(%arg0: i32, %arg1: i32) -> (i32, i32) {
    %c0_i32 = arith.constant 0 : i32
    %c0_i32_0 = arith.constant 0 : i32
    %c0_i32_1 = arith.constant 0 : i32
    return %c0_i32, %c0_i32_0 : i32, i32
  }
  func.func @transform_4(%arg0: i32, %arg1: i32) -> (i32, i32, i32) {
    %c0_i32 = arith.constant 0 : i32
    %c0_i32_0 = arith.constant 0 : i32
    return %arg0, %arg1, %c0_i32 : i32, i32, i32
  }
}

</mosaic_0001>

<llo_original>
// kernel: _patch_expand_call.1
$region0: #{_patch_expand_call.1}
  #allocation0 [shape = 'u32[]', space=smem, size = 0x4, offset = 0x4, fixed_abs, tag = 'smem constant byte address 0x4 - core index']
  #allocation1 [shape = 'u32[144,128]{1,0:T(1,128)}', space=vmem, size = 0x12000, scoped, tag = 'internal scratch']
  %s0 = inlined_call_operand.vmem [shape: f32[2,64,64], index: 0, kind: input, shape index: {}]
  %s1 = inlined_call_operand.vmem [shape: f32[64,128], index: 1, kind: input, shape index: {}]
  %s2 = inlined_call_operand.vmem [shape: f32[1,32], index: 2, kind: input, shape index: {}]
  %s3 = inlined_call_operand.vmem [shape: f32[1,32], index: 3, kind: input, shape index: {}]
  %s4 = inlined_call_operand.vmem [shape: f32[2,16,512], index: 4, kind: output, shape index: {}]
  %s5 = sld [smem:[#allocation0]]
  $region49: #{_patch_expand_call.1} parent=0
    _
  %s7 = ssub.s32 1, %s5
  %s8 = scalar_select 0, %s7, %s5
  loop: start=0, step=1, limit=4
  $region2: #{_patch_expand_call.1} parent=0 // loop_pre_header
    _
  $region3: #{_patch_expand_call.1} parent=0 // loop_header
    %s10 = sphi 0, %s14
    %p11 = scmp.ge.s32.totalorder %s10, 4
    %s17 = sphi 0, %s29
    %s18 = sphi 0, %s25
    %s19 = sphi 0, %s17
    %s20 = sphi 0, %s18
    %s21 = sphi 0, %s19
    %s22 = sphi 0, %s20
    %s34 = sphi 0, %s36
    %s37 = sphi 0, %s34
    %s38 = sphi 0, %s37
    %s54 = sphi 0, %s38
    %s58 = sphi 0, %s58
    %s60 = sphi 0, %s58
    %s61 = sphi 0, %s60
    %s75 = sphi 0, %s61
    %s79 = sphi 0, %s79
    %s81 = sphi 0, %s79
    %s82 = sphi 0, %s81
    %s96 = sphi 0, %s82
    %s100 = sphi 0, %s100
    %s102 = sphi 0, %s100
    %s103 = sphi 0, %s102
    %s117 = sphi 0, %s103
    %s125 = sphi 0, %s127
    %s128 = sphi 0, %s125
    %s129 = sphi 0, %s128
    %s145 = sphi 0, %s129
  $region4: #{_patch_expand_call.1} parent=0 // loop_header_branch
    %13 = sbr.rel (%p11) target = $region8
  $region5: #{_patch_expand_call.1} parent=0 // loop_body
    %s15 = ssub.s32 %s10, 1
    %s16 = ssub.s32 %s10, 2
    %s23 = sadd.s32 1, %s18
    %p24 = scmp.ge.s32.totalorder %s23, 1
    %s25 = scalar_select %p24, 0, %s23
    %s26 = sadd.s32 1, %s17
    %s27 = scalar_select %p24, %s26, %s17
    %p28 = scmp.ge.s32.totalorder %s27, 2
    %s29 = scalar_select %p28, 0, %s27
    %s30 = ssub.s32 %s17, %s29
    %s31 = ssub.s32 %s18, %s25
    %s32 = sor.u32 %s30, %s31
    %p33 = scmp.eq.s32.totalorder %s32, 0
    %s35 = sadd.s32 %s34, 1
    %s36 = scalar_select %p33, %s34, %s35
    %p39 = pneg %p33
    %p40 = scmp.eq.s32.totalorder %s10, 1
    %p41 = por %p39, %p40
    %p42 = scmp.ne.s32.totalorder %s34, %s37
    %p43 = scmp.eq.s32.totalorder %s10, 0
    %p44 = por %p42, %p43
    %p45 = scmp.ne.s32.totalorder %s34, %s37
    %p46 = scmp.eq.s32.totalorder %s15, 1
    %p47 = por %p45, %p46
    %p48 = scmp.ne.s32.totalorder %s37, %s38
    %p49 = scmp.eq.s32.totalorder %s15, 0
    %p50 = por %p48, %p49
    %p51 = scmp.ne.s32.totalorder %s37, %s38
    %p52 = scmp.eq.s32.totalorder %s16, 1
    %p53 = por %p51, %p52
    %p55 = scmp.ne.s32.totalorder %s38, %s54
    %p56 = scmp.eq.s32.totalorder %s16, 0
    %p57 = por %p55, %p56
    %s59 = sadd.s32 %s58, 1
    %p62 = scmp.eq.s32.totalorder %s10, 1
    %p63 = scmp.ne.s32.totalorder %s58, %s60
    %p64 = scmp.eq.s32.totalorder %s10, 0
    %p65 = por %p63, %p64
    %p66 = scmp.ne.s32.totalorder %s58, %s60
    %p67 = scmp.eq.s32.totalorder %s15, 1
    %p68 = por %p66, %p67
    %p69 = scmp.ne.s32.totalorder %s60, %s61
    %p70 = scmp.eq.s32.totalorder %s15, 0
    %p71 = por %p69, %p70
    %p72 = scmp.ne.s32.totalorder %s60, %s61
    %p73 = scmp.eq.s32.totalorder %s16, 1
    %p74 = por %p72, %p73
    %p76 = scmp.ne.s32.totalorder %s61, %s75
    %p77 = scmp.eq.s32.totalorder %s16, 0
    %p78 = por %p76, %p77
    %s80 = sadd.s32 %s79, 1
    %p83 = scmp.eq.s32.totalorder %s10, 1
    %p84 = scmp.ne.s32.totalorder %s79, %s81
    %p85 = scmp.eq.s32.totalorder %s10, 0
    %p86 = por %p84, %p85
    %p87 = scmp.ne.s32.totalorder %s79, %s81
    %p88 = scmp.eq.s32.totalorder %s15, 1
    %p89 = por %p87, %p88
    %p90 = scmp.ne.s32.totalorder %s81, %s82
    %p91 = scmp.eq.s32.totalorder %s15, 0
    %p92 = por %p90, %p91
    %p93 = scmp.ne.s32.totalorder %s81, %s82
    %p94 = scmp.eq.s32.totalorder %s16, 1
    %p95 = por %p93, %p94
    %p97 = scmp.ne.s32.totalorder %s82, %s96
    %p98 = scmp.eq.s32.totalorder %s16, 0
    %p99 = por %p97, %p98
    %s101 = sadd.s32 %s100, 1
    %p104 = scmp.eq.s32.totalorder %s10, 1
    %p105 = scmp.ne.s32.totalorder %s100, %s102
    %p106 = scmp.eq.s32.totalorder %s10, 0
    %p107 = por %p105, %p106
    %p108 = scmp.ne.s32.totalorder %s100, %s102
    %p109 = scmp.eq.s32.totalorder %s15, 1
    %p110 = por %p108, %p109
    %p111 = scmp.ne.s32.totalorder %s102, %s103
    %p112 = scmp.eq.s32.totalorder %s15, 0
    %p113 = por %p111, %p112
    %p114 = scmp.ne.s32.totalorder %s102, %s103
    %p115 = scmp.eq.s32.totalorder %s16, 1
    %p116 = por %p114, %p115
    %p118 = scmp.ne.s32.totalorder %s103, %s117
    %p119 = scmp.eq.s32.totalorder %s16, 0
    %p120 = por %p118, %p119
    %s121 = ssub.s32 %s17, %s29
    %s122 = ssub.s32 %s18, %s25
    %s123 = sor.u32 %s121, %s122
    %p124 = scmp.eq.s32.totalorder %s123, 0
    %s126 = sadd.s32 %s125, 1
    %s127 = scalar_select %p124, %s125, %s126
    %p130 = pneg %p124
    %p131 = scmp.eq.s32.totalorder %s10, 1
    %p132 = por %p130, %p131
    %p133 = scmp.ne.s32.totalorder %s125, %s128
    %p134 = scmp.eq.s32.totalorder %s10, 0
    %p135 = por %p133, %p134
    %p136 = scmp.ne.s32.totalorder %s125, %s128
    %p137 = scmp.eq.s32.totalorder %s15, 1
    %p138 = por %p136, %p137
    %p139 = scmp.ne.s32.totalorder %s128, %s129
    %p140 = scmp.eq.s32.totalorder %s15, 0
    %p141 = por %p139, %p140
    %p142 = scmp.ne.s32.totalorder %s128, %s129
    %p143 = scmp.eq.s32.totalorder %s16, 1
    %p144 = por %p142, %p143
    %p146 = scmp.ne.s32.totalorder %s129, %s145
    %p147 = scmp.eq.s32.totalorder %s16, 0
    %p148 = por %p146, %p147
    %p149 = scmp.le.s32.totalorder 1, %s10
    %p150 = scmp.lt.s32.totalorder %s10, 3
    %p151 = pnand %p149, %p150
    %p152 = pneg %p151
    // Predicated region
    $region9: #{_patch_expand_call.1} parent=5 // pred_check
      _
    $region10: #{_patch_expand_call.1} parent=5 // pred_check_branch
      %154 = sbr.rel (%p151) target = $region12
    $region11: #{_patch_expand_call.1} parent=5 // pred_region
      %s155 = ssub.s32 %s10, 1
      // Predicated region
      $region13: #{_patch_expand_call.1} parent=11 // pred_check
        %p156 = pneg %p71
      $region14: #{_patch_expand_call.1} parent=11 // pred_check_branch
        %158 = sbr.rel (%p156) target = $region16
      $region15: #{_patch_expand_call.1} parent=11 // pred_region
        _
      $region16: #{_patch_expand_call.1} parent=11 // pred_fallthru
        _
      // Predicated region
      $region17: #{_patch_expand_call.1} parent=11 // pred_check
        %p159 = pneg %p92
      $region18: #{_patch_expand_call.1} parent=11 // pred_check_branch
        %161 = sbr.rel (%p159) target = $region20
      $region19: #{_patch_expand_call.1} parent=11 // pred_region
        _
      $region20: #{_patch_expand_call.1} parent=11 // pred_fallthru
        _
      // Predicated region
      $region21: #{_patch_expand_call.1} parent=11 // pred_check
        %p162 = pneg %p113
      $region22: #{_patch_expand_call.1} parent=11 // pred_check_branch
        %164 = sbr.rel (%p162) target = $region24
      $region23: #{_patch_expand_call.1} parent=11 // pred_region
        _
      $region24: #{_patch_expand_call.1} parent=11 // pred_fallthru
        _
    $region12: #{_patch_expand_call.1} parent=5 // pred_fallthru
      _
    %p165 = scmp.lt.s32.totalorder %s10, 2
    // Predicated region
    $region25: #{_patch_expand_call.1} parent=5 // pred_check
      %p166 = pneg %p165
    $region26: #{_patch_expand_call.1} parent=5 // pred_check_branch
      %168 = sbr.rel (%p166) target = $region28
    $region27: #{_patch_expand_call.1} parent=5 // pred_region
      // Predicated region
      $region29: #{_patch_expand_call.1} parent=27 // pred_check
        %p169 = pneg %p44
      $region30: #{_patch_expand_call.1} parent=27 // pred_check_branch
        %171 = sbr.rel (%p169) target = $region32
      $region31: #{_patch_expand_call.1} parent=27 // pred_region
        %p172 = scmp.lt.s32.totalorder %s17, 1
        %s173 = scalar_select %p172, %s17, 1
        %p174 = scmp.lt.s32.totalorder %s18, 0
        %s175 = scalar_select %p174, %s18, 0
        %s176 = smul.addr %s173, 8
        %s177 = sadd.s32 %s175, %s176
        %s178 = smul.addr %s177, 8
        %s179 = scalar_lea.vmem %s0, %s178
      $region32: #{_patch_expand_call.1} parent=27 // pred_fallthru
        _
    $region28: #{_patch_expand_call.1} parent=5 // pred_fallthru
      _
    %p180 = scmp.le.s32.totalorder 1, %s10
    %p181 = scmp.lt.s32.totalorder %s10, 3
    %p182 = pnand %p180, %p181
    %p183 = pneg %p182
    // Predicated region
    $region33: #{_patch_expand_call.1} parent=5 // pred_check
      _
    $region34: #{_patch_expand_call.1} parent=5 // pred_check_branch
      %185 = sbr.rel (%p182) target = $region36
    $region35: #{_patch_expand_call.1} parent=5 // pred_region
      %s186 = ssub.s32 %s10, 1
      %p187 = scmp.lt.s32.totalorder %s19, 1
      %s188 = scalar_select %p187, %s19, 1
      %p189 = scmp.lt.s32.totalorder %s20, 0
      %s190 = scalar_select %p189, %s20, 0
      %s191 = smul.addr %s188, 8
      %s192 = sadd.s32 %s190, %s191
      %s193 = smul.addr %s192, 8
      %s194 = scalar_lea.vmem %s0, %s193
      %p195 = pneg %p50
      %p196 = pneg %p47
      %p197 = pneg %p71
      %p198 = pneg %p68
      %p199 = pneg %p92
      %p200 = pneg %p89
      %p201 = pneg %p113
      %p202 = pneg %p110
      %p203 = pneg %p141
      %p204 = pneg %p138
      %s205 = smul.u32 2, %s20
      %p206 = scmp.lt.s32.totalorder %s19, 1
      %s207 = scalar_select %p206, %s19, 1
      %p208 = scmp.lt.s32.totalorder %s205, 1
      %s209 = scalar_select %p208, %s205, 1
      %s210 = smul.addr %s209, 4
      %s211 = smul.addr %s207, 8
      %s212 = sadd.s32 %s210, %s211
      %s213 = smul.addr %s212, 8
      %s214 = scalar_lea.vmem %s4, %s213
      %p215 = scmp.lt.s32.totalorder %s19, 1
      %s216 = scalar_select %p215, %s19, 1
      %p217 = scmp.lt.s32.totalorder %s20, 0
      %s218 = scalar_select %p217, %s20, 0
      %s219 = smul.addr %s216, 8
      %s220 = sadd.s32 %s218, %s219
      %s221 = smul.addr %s220, 8
      %s222 = scalar_lea.vmem %s0, %s221
      %s223 = smul.u32 2, %s20
      %p224 = scmp.lt.s32.totalorder %s19, 1
      %s225 = scalar_select %p224, %s19, 1
      %p226 = scmp.lt.s32.totalorder %s223, 1
      %s227 = scalar_select %p226, %s223, 1
      %s228 = smul.addr %s227, 4
      %s229 = smul.addr %s225, 8
      %s230 = sadd.s32 %s228, %s229
      %s231 = smul.addr %s230, 8
      %s232 = scalar_lea.vmem %s4, %s231
      %s233 = smul.u32 2, %s20
      %v234 = vld [vmem:[%s222] sm:$0xff]
      %v235 = vld [vmem:[%s222 + $0x8] sm:$0xff]
      %v236 = vld [vmem:[%s222 + $0x10] sm:$0xff]
      %v237 = vld [vmem:[%s222 + $0x18] sm:$0xff]
      %v238 = vld [vmem:[%s222 + $0x20] sm:$0xff]
      %v239 = vld [vmem:[%s222 + $0x28] sm:$0xff]
      %v240 = vld [vmem:[%s222 + $0x30] sm:$0xff]
      %v241 = vld [vmem:[%s222 + $0x38] sm:$0xff]
      %v242 = vld [vmem:[%s1] sm:$0xff]
      %v243 = vld [vmem:[%s1 + $0x8] sm:$0xff]
      %v244 = vld [vmem:[%s1 + $0x10] sm:$0xff]
      %v245 = vld [vmem:[%s1 + $0x18] sm:$0xff]
      %v246 = vld [vmem:[%s1 + $0x20] sm:$0xff]
      %v247 = vld [vmem:[%s1 + $0x28] sm:$0xff]
      %v248 = vld [vmem:[%s1 + $0x30] sm:$0xff]
      %v249 = vld [vmem:[%s1 + $0x38] sm:$0xff]
      %250 = vxpose.xlu0.b32.start [1/16] %v234, 128
      %251 = vxpose.xlu0.b32.cont [2/16] %v235, 128
      %252 = vxpose.xlu0.b32.cont [3/16] %v236, 128
      %253 = vxpose.xlu0.b32.cont [4/16] %v237, 128
      %254 = vxpose.xlu0.b32.cont [5/16] %v238, 128
      %255 = vxpose.xlu0.b32.cont [6/16] %v239, 128
      %256 = vxpose.xlu0.b32.cont [7/16] %v240, 128
      %257 = vxpose.xlu0.b32.cont [8/16] %v241, 128
      %258 = vxpose.xlu0.b32.cont [9/16] 0.0, 128
      %259 = vxpose.xlu0.b32.cont [10/16] 0.0, 128
      %260 = vxpose.xlu0.b32.cont [11/16] 0.0, 128
      %261 = vxpose.xlu0.b32.cont [12/16] 0.0, 128
      %262 = vxpose.xlu0.b32.cont [13/16] 0.0, 128
      %263 = vxpose.xlu0.b32.cont [14/16] 0.0, 128
      %264 = vxpose.xlu0.b32.cont [15/16] 0.0, 128
      %265 = vxpose.xlu0.b32.end [16/16] 0.0, 128
      %v266 = vpop.trf.xlu0
      %v267 = vpop.trf.xlu0
      %v268 = vpop.trf.xlu0
      %v269 = vpop.trf.xlu0
      %v270 = vpop.trf.xlu0
      %v271 = vpop.trf.xlu0
      %v272 = vpop.trf.xlu0
      %v273 = vpop.trf.xlu0
      %v274 = vpop.trf.xlu0
      %v275 = vpop.trf.xlu0
      %v276 = vpop.trf.xlu0
      %v277 = vpop.trf.xlu0
      %v278 = vpop.trf.xlu0
      %v279 = vpop.trf.xlu0
      %v280 = vpop.trf.xlu0
      %v281 = vpop.trf.xlu0
      %vm282 = vcmask 523264
      %v284 = vsel %vm282, %v266, 0
      %v287 = vsel %vm282, %v267, 0
      %v290 = vsel %vm282, %v268, 0
      %v293 = vsel %vm282, %v269, 0
      %v296 = vsel %vm282, %v270, 0
      %v299 = vsel %vm282, %v271, 0
      %v302 = vsel %vm282, %v272, 0
      %v305 = vsel %vm282, %v273, 0
      %307 = vmatprep.subr.mxu0 0.0
      %308 = vmatpush1.msra.mxu0 %v242
      %309 = vmatprep.subr.mxu0 0.0
      %310 = vmatpush1.msra.mxu0 %v243
      %311 = vmatprep.subr.mxu0 0.0
      %312 = vmatpush1.msra.mxu0 %v244
      %313 = vmatprep.subr.mxu0 0.0
      %314 = vmatpush1.msra.mxu0 %v245
      %315 = vmatprep.subr.mxu0 0.0
      %316 = vmatpush1.msra.mxu0 %v246
      %317 = vmatprep.subr.mxu0 0.0
      %318 = vmatpush1.msra.mxu0 %v247
      %319 = vmatprep.subr.mxu0 0.0
      %320 = vmatpush1.msra.mxu0 %v248
      %321 = vmatprep.subr.mxu0 0.0
      %322 = vmatpush1.msra.mxu0 %v249
      %323 = vmatprep.subr.mxu0 0.0
      %324 = vmatpush1.msra.mxu0 0.0
      %325 = vmatprep.subr.mxu0 0.0
      %326 = vmatpush1.msra.mxu0 0.0
      %327 = vmatprep.subr.mxu0 0.0
      %328 = vmatpush1.msra.mxu0 0.0
      %329 = vmatprep.subr.mxu0 0.0
      %330 = vmatpush1.msra.mxu0 0.0
      %331 = vmatprep.subr.mxu0 0.0
      %332 = vmatpush1.msra.mxu0 0.0
      %333 = vmatprep.subr.mxu0 0.0
      %334 = vmatpush1.msra.mxu0 0.0
      %335 = vmatprep.subr.mxu0 0.0
      %336 = vmatpush1.msra.mxu0 0.0
      %337 = vmatprep.subr.mxu0 0.0
      %338 = vmatpush1.msra.mxu0 0.0
      %339 = vmatprep.subr.mxu0 0.0
      %340 = vmatpush1.msra.mxu0 0.0
      %341 = vmatprep.subr.mxu0 0.0
      %342 = vmatpush1.msra.mxu0 0.0
      %343 = vmatprep.subr.mxu0 0.0
      %344 = vmatpush1.msra.mxu0 0.0
      %345 = vmatprep.subr.mxu0 0.0
      %346 = vmatpush1.msra.mxu0 0.0
      %347 = vmatprep.subr.mxu0 0.0
      %348 = vmatpush1.msra.mxu0 0.0
      %349 = vmatprep.subr.mxu0 0.0
      %350 = vmatpush1.msra.mxu0 0.0
      %351 = vmatprep.subr.mxu0 0.0
      %352 = vmatpush1.msra.mxu0 0.0
      %353 = vmatprep.subr.mxu0 0.0
      %354 = vmatpush1.msra.mxu0 0.0
      %355 = vmatprep.subr.mxu0 0.0
      %356 = vmatpush1.msra.mxu0 0.0
      %357 = vmatprep.subr.mxu0 0.0
      %358 = vmatpush1.msra.mxu0 0.0
      %359 = vmatprep.subr.mxu0 0.0
      %360 = vmatpush1.msra.mxu0 0.0
      %361 = vmatprep.subr.mxu0 0.0
      %362 = vmatpush1.msra.mxu0 0.0
      %363 = vmatprep.subr.mxu0 0.0
      %364 = vmatpush1.msra.mxu0 0.0
      %365 = vmatprep.subr.mxu0 0.0
      %366 = vmatpush1.msra.mxu0 0.0
      %367 = vmatprep.subr.mxu0 0.0
      %368 = vmatpush1.msra.mxu0 0.0
      %369 = vmatprep.subr.mxu0 0.0
      %370 = vmatpush1.msra.mxu0 0.0
      %371 = vmatprep.mubr.f32.mxu0 0.0
      %372 = vmatmul.mubr.f32.gmra.mrb[0].mxu0 %v284
      %v373 = vpop.f32.mrb[0].mxu0
      %v374 = vadd.f32 0.0, %v373
      %v375 = vpop.f32.mrb[0].mxu0
      %376 = vmatprep.mubr.f32.mxu0 0.0
      %377 = vmatmul.mubr.f32.gmra.mrb[0].mxu0 %v287
      %v378 = vpop.f32.mrb[0].mxu0
      %v379 = vadd.f32 0.0, %v378
      %v380 = vpop.f32.mrb[0].mxu0
      %381 = vmatprep.mubr.f32.mxu0 0.0
      %382 = vmatmul.mubr.f32.gmra.mrb[0].mxu0 %v290
      %v383 = vpop.f32.mrb[0].mxu0
      %v384 = vadd.f32 0.0, %v383
      %v385 = vpop.f32.mrb[0].mxu0
      %386 = vmatprep.mubr.f32.mxu0 0.0
      %387 = vmatmul.mubr.f32.gmra.mrb[0].mxu0 %v293
      %v388 = vpop.f32.mrb[0].mxu0
      %v389 = vadd.f32 0.0, %v388
      %v390 = vpop.f32.mrb[0].mxu0
      %391 = vmatprep.mubr.f32.mxu0 0.0
      %392 = vmatmul.mubr.f32.gmra.mrb[0].mxu0 %v296
      %v393 = vpop.f32.mrb[0].mxu0
      %v394 = vadd.f32 0.0, %v393
      %v395 = vpop.f32.mrb[0].mxu0
      %396 = vmatprep.mubr.f32.mxu0 0.0
      %397 = vmatmul.mubr.f32.gmra.mrb[0].mxu0 %v299
      %v398 = vpop.f32.mrb[0].mxu0
      %v399 = vadd.f32 0.0, %v398
      %v400 = vpop.f32.mrb[0].mxu0
      %401 = vmatprep.mubr.f32.mxu0 0.0
      %402 = vmatmul.mubr.f32.gmra.mrb[0].mxu0 %v302
      %v403 = vpop.f32.mrb[0].mxu0
      %v404 = vadd.f32 0.0, %v403
      %v405 = vpop.f32.mrb[0].mxu0
      %406 = vmatprep.mubr.f32.mxu0 0.0
      %407 = vmatmul.mubr.f32.gmra.mrb[0].mxu0 %v305
      %v408 = vpop.f32.mrb[0].mxu0
      %v409 = vadd.f32 0.0, %v408
      %v410 = vpop.f32.mrb[0].mxu0
      %411 = vdwg.mxu0
      %v412 = vld [vmem:[%s2] sm:$0x1]
      %v413 = vld [vmem:[%s3] sm:$0x1]
      %vm414 = vcmask 261120
      %v415 = vsel %vm414, %v374, 0.0
      %416 = vadd.xlane.f32.xlu0 %v415
      %v417 = vpop.xlane.xlu0 %416
      %v418 = vsel %vm414, %v379, 0.0
      %419 = vadd.xlane.f32.xlu0 %v418
      %v420 = vpop.xlane.xlu0 %419
      %v421 = vsel %vm414, %v384, 0.0
      %422 = vadd.xlane.f32.xlu0 %v421
      %v423 = vpop.xlane.xlu0 %422
      %v424 = vsel %vm414, %v389, 0.0
      %425 = vadd.xlane.f32.xlu0 %v424
      %v426 = vpop.xlane.xlu0 %425
      %v427 = vsel %vm414, %v394, 0.0
      %428 = vadd.xlane.f32.xlu0 %v427
      %v429 = vpop.xlane.xlu0 %428
      %v430 = vsel %vm414, %v399, 0.0
      %431 = vadd.xlane.f32.xlu0 %v430
      %v432 = vpop.xlane.xlu0 %431
      %v433 = vsel %vm414, %v404, 0.0
      %434 = vadd.xlane.f32.xlu0 %v433
      %v435 = vpop.xlane.xlu0 %434
      %v436 = vsel %vm414, %v409, 0.0
      %437 = vadd.xlane.f32.xlu0 %v436
      %v438 = vpop.xlane.xlu0 %437
      %v439 = vrcp.pop 32.0
      %v440 = vmul.f32 %v417, %v439
      %v441 = vmul.f32 %v420, %v439
      %v442 = vmul.f32 %v423, %v439
      %v443 = vmul.f32 %v426, %v439
      %v444 = vmul.f32 %v429, %v439
      %v445 = vmul.f32 %v432, %v439
      %v446 = vmul.f32 %v435, %v439
      %v447 = vmul.f32 %v438, %v439
      %v448 = vsub.f32 %v374, %v440
      %v449 = vsub.f32 %v379, %v441
      %v450 = vsub.f32 %v384, %v442
      %v451 = vsub.f32 %v389, %v443
      %v452 = vsub.f32 %v394, %v444
      %v453 = vsub.f32 %v399, %v445
      %v454 = vsub.f32 %v404, %v446
      %v455 = vsub.f32 %v409, %v447
      %v456 = vmul.f32 %v448, %v448
      %v457 = vmul.f32 %v449, %v449
      %v458 = vmul.f32 %v450, %v450
      %v459 = vmul.f32 %v451, %v451
      %v460 = vmul.f32 %v452, %v452
      %v461 = vmul.f32 %v453, %v453
      %v462 = vmul.f32 %v454, %v454
      %v463 = vmul.f32 %v455, %v455
      %v464 = vsel %vm414, %v456, 0.0
      %465 = vadd.xlane.f32.xlu0 %v464
      %v466 = vpop.xlane.xlu0 %465
      %v467 = vsel %vm414, %v457, 0.0
      %468 = vadd.xlane.f32.xlu0 %v467
      %v469 = vpop.xlane.xlu0 %468
      %v470 = vsel %vm414, %v458, 0.0
      %471 = vadd.xlane.f32.xlu0 %v470
      %v472 = vpop.xlane.xlu0 %471
      %v473 = vsel %vm414, %v459, 0.0
      %474 = vadd.xlane.f32.xlu0 %v473
      %v475 = vpop.xlane.xlu0 %474
      %v476 = vsel %vm414, %v460, 0.0
      %477 = vadd.xlane.f32.xlu0 %v476
      %v478 = vpop.xlane.xlu0 %477
      %v479 = vsel %vm414, %v461, 0.0
      %480 = vadd.xlane.f32.xlu0 %v479
      %v481 = vpop.xlane.xlu0 %480
      %v482 = vsel %vm414, %v462, 0.0
      %483 = vadd.xlane.f32.xlu0 %v482
      %v484 = vpop.xlane.xlu0 %483
      %v485 = vsel %vm414, %v463, 0.0
      %486 = vadd.xlane.f32.xlu0 %v485
      %v487 = vpop.xlane.xlu0 %486
      %v488 = vmul.f32 %v466, %v439
      %v489 = vmul.f32 %v469, %v439
      %v490 = vmul.f32 %v472, %v439
      %v491 = vmul.f32 %v475, %v439
      %v492 = vmul.f32 %v478, %v439
      %v493 = vmul.f32 %v481, %v439
      %v494 = vmul.f32 %v484, %v439
      %v495 = vmul.f32 %v487, %v439
      %v496 = vadd.f32 %v488, 1e-05
      %v497 = vadd.f32 %v489, 1e-05
      %v498 = vadd.f32 %v490, 1e-05
      %v499 = vadd.f32 %v491, 1e-05
      %v500 = vadd.f32 %v492, 1e-05
      %v501 = vadd.f32 %v493, 1e-05
      %v502 = vadd.f32 %v494, 1e-05
      %v503 = vadd.f32 %v495, 1e-05
      %v504 = vrsqrt.pop %v496
      %v505 = vrsqrt.pop %v497
      %v506 = vrsqrt.pop %v498
      %v507 = vrsqrt.pop %v499
      %v508 = vrsqrt.pop %v500
      %v509 = vrsqrt.pop %v501
      %v510 = vrsqrt.pop %v502
      %v511 = vrsqrt.pop %v503
      %v512 = vmul.f32 %v448, %v504
      %v513 = vmul.f32 %v449, %v505
      %v514 = vmul.f32 %v450, %v506
      %v515 = vmul.f32 %v451, %v507
      %v516 = vmul.f32 %v452, %v508
      %v517 = vmul.f32 %v453, %v509
      %v518 = vmul.f32 %v454, %v510
      %v519 = vmul.f32 %v455, %v511
      %v521 = vlaneseq
      %v522 = vshrl.u32 %v521, 7
      %v523 = vsub.s32 0, %v522
      %v524 = vrot.slane %v412, %v523
      %v526 = vmul.f32 %v512, %v524
      %v527 = vmul.f32 %v513, %v524
      %v528 = vmul.f32 %v514, %v524
      %v529 = vmul.f32 %v515, %v524
      %v530 = vmul.f32 %v516, %v524
      %v531 = vmul.f32 %v517, %v524
      %v532 = vmul.f32 %v518, %v524
      %v533 = vmul.f32 %v519, %v524
      %v535 = vlaneseq
      %v536 = vshrl.u32 %v535, 7
      %v537 = vsub.s32 0, %v536
      %v538 = vrot.slane %v413, %v537
      %v540 = vadd.f32 %v526, %v538
      %v541 = vadd.f32 %v527, %v538
      %v542 = vadd.f32 %v528, %v538
      %v543 = vadd.f32 %v529, %v538
      %v544 = vadd.f32 %v530, %v538
      %v545 = vadd.f32 %v531, %v538
      %v546 = vadd.f32 %v532, %v538
      %v547 = vadd.f32 %v533, %v538
      %556 = vrot.lane.b32.xlu0 %v374, 96
      %v557 = vpop.permute.xlu0 %556
      %558 = vrot.lane.b32.xlu0 %v379, 96
      %v559 = vpop.permute.xlu0 %558
      %560 = vrot.lane.b32.xlu0 %v384, 96
      %v561 = vpop.permute.xlu0 %560
      %562 = vrot.lane.b32.xlu0 %v389, 96
      %v563 = vpop.permute.xlu0 %562
      %564 = vrot.lane.b32.xlu0 %v394, 96
      %v565 = vpop.permute.xlu0 %564
      %566 = vrot.lane.b32.xlu0 %v399, 96
      %v567 = vpop.permute.xlu0 %566
      %568 = vrot.lane.b32.xlu0 %v404, 96
      %v569 = vpop.permute.xlu0 %568
      %570 = vrot.lane.b32.xlu0 %v409, 96
      %v571 = vpop.permute.xlu0 %570
      %v580 = vsel %vm414, %v557, 0.0
      %581 = vadd.xlane.f32.xlu0 %v580
      %v582 = vpop.xlane.xlu0 %581
      %v583 = vsel %vm414, %v559, 0.0
      %584 = vadd.xlane.f32.xlu0 %v583
      %v585 = vpop.xlane.xlu0 %584
      %v586 = vsel %vm414, %v561, 0.0
      %587 = vadd.xlane.f32.xlu0 %v586
      %v588 = vpop.xlane.xlu0 %587
      %v589 = vsel %vm414, %v563, 0.0
      %590 = vadd.xlane.f32.xlu0 %v589
      %v591 = vpop.xlane.xlu0 %590
      %v592 = vsel %vm414, %v565, 0.0
      %593 = vadd.xlane.f32.xlu0 %v592
      %v594 = vpop.xlane.xlu0 %593
      %v595 = vsel %vm414, %v567, 0.0
      %596 = vadd.xlane.f32.xlu0 %v595
      %v597 = vpop.xlane.xlu0 %596
      %v598 = vsel %vm414, %v569, 0.0
      %599 = vadd.xlane.f32.xlu0 %v598
      %v600 = vpop.xlane.xlu0 %599
      %v601 = vsel %vm414, %v571, 0.0
      %602 = vadd.xlane.f32.xlu0 %v601
      %v603 = vpop.xlane.xlu0 %602
      %v604 = vmul.f32 %v582, %v439
      %v605 = vmul.f32 %v585, %v439
      %v606 = vmul.f32 %v588, %v439
      %v607 = vmul.f32 %v591, %v439
      %v608 = vmul.f32 %v594, %v439
      %v609 = vmul.f32 %v597, %v439
      %v610 = vmul.f32 %v600, %v439
      %v611 = vmul.f32 %v603, %v439
      %v612 = vsub.f32 %v374, %v604
      %v613 = vsub.f32 %v379, %v605
      %v614 = vsub.f32 %v384, %v606
      %v615 = vsub.f32 %v389, %v607
      %v616 = vsub.f32 %v394, %v608
      %v617 = vsub.f32 %v399, %v609
      %v618 = vsub.f32 %v404, %v610
      %v619 = vsub.f32 %v409, %v611
      %v620 = vmul.f32 %v612, %v612
      %v621 = vmul.f32 %v613, %v613
      %v622 = vmul.f32 %v614, %v614
      %v623 = vmul.f32 %v615, %v615
      %v624 = vmul.f32 %v616, %v616
      %v625 = vmul.f32 %v617, %v617
      %v626 = vmul.f32 %v618, %v618
      %v627 = vmul.f32 %v619, %v619
      %636 = vrot.lane.b32.xlu0 %v620, 96
      %v637 = vpop.permute.xlu0 %636
      %638 = vrot.lane.b32.xlu0 %v621, 96
      %v639 = vpop.permute.xlu0 %638
      %640 = vrot.lane.b32.xlu0 %v622, 96
      %v641 = vpop.permute.xlu0 %640
      %642 = vrot.lane.b32.xlu0 %v623, 96
      %v643 = vpop.permute.xlu0 %642
      %644 = vrot.lane.b32.xlu0 %v624, 96
      %v645 = vpop.permute.xlu0 %644
      %646 = vrot.lane.b32.xlu0 %v625, 96
      %v647 = vpop.permute.xlu0 %646
      %648 = vrot.lane.b32.xlu0 %v626, 96
      %v649 = vpop.permute.xlu0 %648
      %650 = vrot.lane.b32.xlu0 %v627, 96
      %v651 = vpop.permute.xlu0 %650
      %v660 = vsel %vm414, %v637, 0.0
      %661 = vadd.xlane.f32.xlu0 %v660
      %v662 = vpop.xlane.xlu0 %661
      %v663 = vsel %vm414, %v639, 0.0
      %664 = vadd.xlane.f32.xlu0 %v663
      %v665 = vpop.xlane.xlu0 %664
      %v666 = vsel %vm414, %v641, 0.0
      %667 = vadd.xlane.f32.xlu0 %v666
      %v668 = vpop.xlane.xlu0 %667
      %v669 = vsel %vm414, %v643, 0.0
      %670 = vadd.xlane.f32.xlu0 %v669
      %v671 = vpop.xlane.xlu0 %670
      %v672 = vsel %vm414, %v645, 0.0
      %673 = vadd.xlane.f32.xlu0 %v672
      %v674 = vpop.xlane.xlu0 %673
      %v675 = vsel %vm414, %v647, 0.0
      %676 = vadd.xlane.f32.xlu0 %v675
      %v677 = vpop.xlane.xlu0 %676
      %v678 = vsel %vm414, %v649, 0.0
      %679 = vadd.xlane.f32.xlu0 %v678
      %v680 = vpop.xlane.xlu0 %679
      %v681 = vsel %vm414, %v651, 0.0
      %682 = vadd.xlane.f32.xlu0 %v681
      %v683 = vpop.xlane.xlu0 %682
      %v684 = vmul.f32 %v662, %v439
      %v685 = vmul.f32 %v665, %v439
      %v686 = vmul.f32 %v668, %v439
      %v687 = vmul.f32 %v671, %v439
      %v688 = vmul.f32 %v674, %v439
      %v689 = vmul.f32 %v677, %v439
      %v690 = vmul.f32 %v680, %v439
      %v691 = vmul.f32 %v683, %v439
      %v692 = vadd.f32 %v684, 1e-05
      %v693 = vadd.f32 %v685, 1e-05
      %v694 = vadd.f32 %v686, 1e-05
      %v695 = vadd.f32 %v687, 1e-05
      %v696 = vadd.f32 %v688, 1e-05
      %v697 = vadd.f32 %v689, 1e-05
      %v698 = vadd.f32 %v690, 1e-05
      %v699 = vadd.f32 %v691, 1e-05
      %v700 = vrsqrt.pop %v692
      %v701 = vrsqrt.pop %v693
      %v702 = vrsqrt.pop %v694
      %v703 = vrsqrt.pop %v695
      %v704 = vrsqrt.pop %v696
      %v705 = vrsqrt.pop %v697
      %v706 = vrsqrt.pop %v698
      %v707 = vrsqrt.pop %v699
      %v708 = vmul.f32 %v612, %v700
      %v709 = vmul.f32 %v613, %v701
      %v710 = vmul.f32 %v614, %v702
      %v711 = vmul.f32 %v615, %v703
      %v712 = vmul.f32 %v616, %v704
      %v713 = vmul.f32 %v617, %v705
      %v714 = vmul.f32 %v618, %v706
      %v715 = vmul.f32 %v619, %v707
      %716 = vrot.lane.b32.xlu0 %v524, 32
      %v717 = vpop.permute.xlu0 %716
      %v719 = vmul.f32 %v708, %v717
      %v720 = vmul.f32 %v709, %v717
      %v721 = vmul.f32 %v710, %v717
      %v722 = vmul.f32 %v711, %v717
      %v723 = vmul.f32 %v712, %v717
      %v724 = vmul.f32 %v713, %v717
      %v725 = vmul.f32 %v714, %v717
      %v726 = vmul.f32 %v715, %v717
      %727 = vrot.lane.b32.xlu0 %v538, 32
      %v728 = vpop.permute.xlu0 %727
      %v730 = vadd.f32 %v719, %v728
      %v731 = vadd.f32 %v720, %v728
      %v732 = vadd.f32 %v721, %v728
      %v733 = vadd.f32 %v722, %v728
      %v734 = vadd.f32 %v723, %v728
      %v735 = vadd.f32 %v724, %v728
      %v736 = vadd.f32 %v725, %v728
      %v737 = vadd.f32 %v726, %v728
      %738 = vrot.lane.b32.xlu0 %v374, 64
      %v739 = vpop.permute.xlu0 %738
      %740 = vrot.lane.b32.xlu0 %v379, 64
      %v741 = vpop.permute.xlu0 %740
      %742 = vrot.lane.b32.xlu0 %v384, 64
      %v743 = vpop.permute.xlu0 %742
      %744 = vrot.lane.b32.xlu0 %v389, 64
      %v745 = vpop.permute.xlu0 %744
      %746 = vrot.lane.b32.xlu0 %v394, 64
      %v747 = vpop.permute.xlu0 %746
      %748 = vrot.lane.b32.xlu0 %v399, 64
      %v749 = vpop.permute.xlu0 %748
      %750 = vrot.lane.b32.xlu0 %v404, 64
      %v751 = vpop.permute.xlu0 %750
      %752 = vrot.lane.b32.xlu0 %v409, 64
      %v753 = vpop.permute.xlu0 %752
      %v762 = vsel %vm414, %v739, 0.0
      %763 = vadd.xlane.f32.xlu0 %v762
      %v764 = vpop.xlane.xlu0 %763
      %v765 = vsel %vm414, %v741, 0.0
      %766 = vadd.xlane.f32.xlu0 %v765
      %v767 = vpop.xlane.xlu0 %766
      %v768 = vsel %vm414, %v743, 0.0
      %769 = vadd.xlane.f32.xlu0 %v768
      %v770 = vpop.xlane.xlu0 %769
      %v771 = vsel %vm414, %v745, 0.0
      %772 = vadd.xlane.f32.xlu0 %v771
      %v773 = vpop.xlane.xlu0 %772
      %v774 = vsel %vm414, %v747, 0.0
      %775 = vadd.xlane.f32.xlu0 %v774
      %v776 = vpop.xlane.xlu0 %775
      %v777 = vsel %vm414, %v749, 0.0
      %778 = vadd.xlane.f32.xlu0 %v777
      %v779 = vpop.xlane.xlu0 %778
      %v780 = vsel %vm414, %v751, 0.0
      %781 = vadd.xlane.f32.xlu0 %v780
      %v782 = vpop.xlane.xlu0 %781
      %v783 = vsel %vm414, %v753, 0.0
      %784 = vadd.xlane.f32.xlu0 %v783
      %v785 = vpop.xlane.xlu0 %784
      %v786 = vmul.f32 %v764, %v439
      %v787 = vmul.f32 %v767, %v439
      %v788 = vmul.f32 %v770, %v439
      %v789 = vmul.f32 %v773, %v439
      %v790 = vmul.f32 %v776, %v439
      %v791 = vmul.f32 %v779, %v439
      %v792 = vmul.f32 %v782, %v439
      %v793 = vmul.f32 %v785, %v439
      %v794 = vsub.f32 %v374, %v786
      %v795 = vsub.f32 %v379, %v787
      %v796 = vsub.f32 %v384, %v788
      %v797 = vsub.f32 %v389, %v789
      %v798 = vsub.f32 %v394, %v790
      %v799 = vsub.f32 %v399, %v791
      %v800 = vsub.f32 %v404, %v792
      %v801 = vsub.f32 %v409, %v793
      %v802 = vmul.f32 %v794, %v794
      %v803 = vmul.f32 %v795, %v795
      %v804 = vmul.f32 %v796, %v796
      %v805 = vmul.f32 %v797, %v797
      %v806 = vmul.f32 %v798, %v798
      %v807 = vmul.f32 %v799, %v799
      %v808 = vmul.f32 %v800, %v800
      %v809 = vmul.f32 %v801, %v801
      %818 = vrot.lane.b32.xlu0 %v802, 64
      %v819 = vpop.permute.xlu0 %818
      %820 = vrot.lane.b32.xlu0 %v803, 64
      %v821 = vpop.permute.xlu0 %820
      %822 = vrot.lane.b32.xlu0 %v804, 64
      %v823 = vpop.permute.xlu0 %822
      %824 = vrot.lane.b32.xlu0 %v805, 64
      %v825 = vpop.permute.xlu0 %824
      %826 = vrot.lane.b32.xlu0 %v806, 64
      %v827 = vpop.permute.xlu0 %826
      %828 = vrot.lane.b32.xlu0 %v807, 64
      %v829 = vpop.permute.xlu0 %828
      %830 = vrot.lane.b32.xlu0 %v808, 64
      %v831 = vpop.permute.xlu0 %830
      %832 = vrot.lane.b32.xlu0 %v809, 64
      %v833 = vpop.permute.xlu0 %832
      %v842 = vsel %vm414, %v819, 0.0
      %843 = vadd.xlane.f32.xlu0 %v842
      %v844 = vpop.xlane.xlu0 %843
      %v845 = vsel %vm414, %v821, 0.0
      %846 = vadd.xlane.f32.xlu0 %v845
      %v847 = vpop.xlane.xlu0 %846
      %v848 = vsel %vm414, %v823, 0.0
      %849 = vadd.xlane.f32.xlu0 %v848
      %v850 = vpop.xlane.xlu0 %849
      %v851 = vsel %vm414, %v825, 0.0
      %852 = vadd.xlane.f32.xlu0 %v851
      %v853 = vpop.xlane.xlu0 %852
      %v854 = vsel %vm414, %v827, 0.0
      %855 = vadd.xlane.f32.xlu0 %v854
      %v856 = vpop.xlane.xlu0 %855
      %v857 = vsel %vm414, %v829, 0.0
      %858 = vadd.xlane.f32.xlu0 %v857
      %v859 = vpop.xlane.xlu0 %858
      %v860 = vsel %vm414, %v831, 0.0
      %861 = vadd.xlane.f32.xlu0 %v860
      %v862 = vpop.xlane.xlu0 %861
      %v863 = vsel %vm414, %v833, 0.0
      %864 = vadd.xlane.f32.xlu0 %v863
      %v865 = vpop.xlane.xlu0 %864
      %v866 = vmul.f32 %v844, %v439
      %v867 = vmul.f32 %v847, %v439
      %v868 = vmul.f32 %v850, %v439
      %v869 = vmul.f32 %v853, %v439
      %v870 = vmul.f32 %v856, %v439
      %v871 = vmul.f32 %v859, %v439
      %v872 = vmul.f32 %v862, %v439
      %v873 = vmul.f32 %v865, %v439
      %v874 = vadd.f32 %v866, 1e-05
      %v875 = vadd.f32 %v867, 1e-05
      %v876 = vadd.f32 %v868, 1e-05
      %v877 = vadd.f32 %v869, 1e-05
      %v878 = vadd.f32 %v870, 1e-05
      %v879 = vadd.f32 %v871, 1e-05
      %v880 = vadd.f32 %v872, 1e-05
      %v881 = vadd.f32 %v873, 1e-05
      %v882 = vrsqrt.pop %v874
      %v883 = vrsqrt.pop %v875
      %v884 = vrsqrt.pop %v876
      %v885 = vrsqrt.pop %v877
      %v886 = vrsqrt.pop %v878
      %v887 = vrsqrt.pop %v879
      %v888 = vrsqrt.pop %v880
      %v889 = vrsqrt.pop %v881
      %v890 = vmul.f32 %v794, %v882
      %v891 = vmul.f32 %v795, %v883
      %v892 = vmul.f32 %v796, %v884
      %v893 = vmul.f32 %v797, %v885
      %v894 = vmul.f32 %v798, %v886
      %v895 = vmul.f32 %v799, %v887
      %v896 = vmul.f32 %v800, %v888
      %v897 = vmul.f32 %v801, %v889
      %898 = vrot.lane.b32.xlu0 %v524, 64
      %v899 = vpop.permute.xlu0 %898
      %v901 = vmul.f32 %v890, %v899
      %v902 = vmul.f32 %v891, %v899
      %v903 = vmul.f32 %v892, %v899
      %v904 = vmul.f32 %v893, %v899
      %v905 = vmul.f32 %v894, %v899
      %v906 = vmul.f32 %v895, %v899
      %v907 = vmul.f32 %v896, %v899
      %v908 = vmul.f32 %v897, %v899
      %909 = vrot.lane.b32.xlu0 %v538, 64
      %v910 = vpop.permute.xlu0 %909
      %v912 = vadd.f32 %v901, %v910
      %v913 = vadd.f32 %v902, %v910
      %v914 = vadd.f32 %v903, %v910
      %v915 = vadd.f32 %v904, %v910
      %v916 = vadd.f32 %v905, %v910
      %v917 = vadd.f32 %v906, %v910
      %v918 = vadd.f32 %v907, %v910
      %v919 = vadd.f32 %v908, %v910
      %920 = vrot.lane.b32.xlu0 %v374, 32
      %v921 = vpop.permute.xlu0 %920
      %922 = vrot.lane.b32.xlu0 %v379, 32
      %v923 = vpop.permute.xlu0 %922
      %924 = vrot.lane.b32.xlu0 %v384, 32
      %v925 = vpop.permute.xlu0 %924
      %926 = vrot.lane.b32.xlu0 %v389, 32
      %v927 = vpop.permute.xlu0 %926
      %928 = vrot.lane.b32.xlu0 %v394, 32
      %v929 = vpop.permute.xlu0 %928
      %930 = vrot.lane.b32.xlu0 %v399, 32
      %v931 = vpop.permute.xlu0 %930
      %932 = vrot.lane.b32.xlu0 %v404, 32
      %v933 = vpop.permute.xlu0 %932
      %934 = vrot.lane.b32.xlu0 %v409, 32
      %v935 = vpop.permute.xlu0 %934
      %v944 = vsel %vm414, %v921, 0.0
      %945 = vadd.xlane.f32.xlu0 %v944
      %v946 = vpop.xlane.xlu0 %945
      %v947 = vsel %vm414, %v923, 0.0
      %948 = vadd.xlane.f32.xlu0 %v947
      %v949 = vpop.xlane.xlu0 %948
      %v950 = vsel %vm414, %v925, 0.0
      %951 = vadd.xlane.f32.xlu0 %v950
      %v952 = vpop.xlane.xlu0 %951
      %v953 = vsel %vm414, %v927, 0.0
      %954 = vadd.xlane.f32.xlu0 %v953
      %v955 = vpop.xlane.xlu0 %954
      %v956 = vsel %vm414, %v929, 0.0
      %957 = vadd.xlane.f32.xlu0 %v956
      %v958 = vpop.xlane.xlu0 %957
      %v959 = vsel %vm414, %v931, 0.0
      %960 = vadd.xlane.f32.xlu0 %v959
      %v961 = vpop.xlane.xlu0 %960
      %v962 = vsel %vm414, %v933, 0.0
      %963 = vadd.xlane.f32.xlu0 %v962
      %v964 = vpop.xlane.xlu0 %963
      %v965 = vsel %vm414, %v935, 0.0
      %966 = vadd.xlane.f32.xlu0 %v965
      %v967 = vpop.xlane.xlu0 %966
      %v968 = vmul.f32 %v946, %v439
      %v969 = vmul.f32 %v949, %v439
      %v970 = vmul.f32 %v952, %v439
      %v971 = vmul.f32 %v955, %v439
      %v972 = vmul.f32 %v958, %v439
      %v973 = vmul.f32 %v961, %v439
      %v974 = vmul.f32 %v964, %v439
      %v975 = vmul.f32 %v967, %v439
      %v976 = vsub.f32 %v374, %v968
      %v977 = vsub.f32 %v379, %v969
      %v978 = vsub.f32 %v384, %v970
      %v979 = vsub.f32 %v389, %v971
      %v980 = vsub.f32 %v394, %v972
      %v981 = vsub.f32 %v399, %v973
      %v982 = vsub.f32 %v404, %v974
      %v983 = vsub.f32 %v409, %v975
      %v984 = vmul.f32 %v976, %v976
      %v985 = vmul.f32 %v977, %v977
      %v986 = vmul.f32 %v978, %v978
      %v987 = vmul.f32 %v979, %v979
      %v988 = vmul.f32 %v980, %v980
      %v989 = vmul.f32 %v981, %v981
      %v990 = vmul.f32 %v982, %v982
      %v991 = vmul.f32 %v983, %v983
      %1000 = vrot.lane.b32.xlu0 %v984, 32
      %v1001 = vpop.permute.xlu0 %1000
      %1002 = vrot.lane.b32.xlu0 %v985, 32
      %v1003 = vpop.permute.xlu0 %1002
      %1004 = vrot.lane.b32.xlu0 %v986, 32
      %v1005 = vpop.permute.xlu0 %1004
      %1006 = vrot.lane.b32.xlu0 %v987, 32
      %v1007 = vpop.permute.xlu0 %1006
      %1008 = vrot.lane.b32.xlu0 %v988, 32
      %v1009 = vpop.permute.xlu0 %1008
      %1010 = vrot.lane.b32.xlu0 %v989, 32
      %v1011 = vpop.permute.xlu0 %1010
      %1012 = vrot.lane.b32.xlu0 %v990, 32
      %v1013 = vpop.permute.xlu0 %1012
      %1014 = vrot.lane.b32.xlu0 %v991, 32
      %v1015 = vpop.permute.xlu0 %1014
      %v1024 = vsel %vm414, %v1001, 0.0
      %1025 = vadd.xlane.f32.xlu0 %v1024
      %v1026 = vpop.xlane.xlu0 %1025
      %v1027 = vsel %vm414, %v1003, 0.0
      %1028 = vadd.xlane.f32.xlu0 %v1027
      %v1029 = vpop.xlane.xlu0 %1028
      %v1030 = vsel %vm414, %v1005, 0.0
      %1031 = vadd.xlane.f32.xlu0 %v1030
      %v1032 = vpop.xlane.xlu0 %1031
      %v1033 = vsel %vm414, %v1007, 0.0
      %1034 = vadd.xlane.f32.xlu0 %v1033
      %v1035 = vpop.xlane.xlu0 %1034
      %v1036 = vsel %vm414, %v1009, 0.0
      %1037 = vadd.xlane.f32.xlu0 %v1036
      %v1038 = vpop.xlane.xlu0 %1037
      %v1039 = vsel %vm414, %v1011, 0.0
      %1040 = vadd.xlane.f32.xlu0 %v1039
      %v1041 = vpop.xlane.xlu0 %1040
      %v1042 = vsel %vm414, %v1013, 0.0
      %1043 = vadd.xlane.f32.xlu0 %v1042
      %v1044 = vpop.xlane.xlu0 %1043
      %v1045 = vsel %vm414, %v1015, 0.0
      %1046 = vadd.xlane.f32.xlu0 %v1045
      %v1047 = vpop.xlane.xlu0 %1046
      %v1048 = vmul.f32 %v1026, %v439
      %v1049 = vmul.f32 %v1029, %v439
      %v1050 = vmul.f32 %v1032, %v439
      %v1051 = vmul.f32 %v1035, %v439
      %v1052 = vmul.f32 %v1038, %v439
      %v1053 = vmul.f32 %v1041, %v439
      %v1054 = vmul.f32 %v1044, %v439
      %v1055 = vmul.f32 %v1047, %v439
      %v1056 = vadd.f32 %v1048, 1e-05
      %v1057 = vadd.f32 %v1049, 1e-05
      %v1058 = vadd.f32 %v1050, 1e-05
      %v1059 = vadd.f32 %v1051, 1e-05
      %v1060 = vadd.f32 %v1052, 1e-05
      %v1061 = vadd.f32 %v1053, 1e-05
      %v1062 = vadd.f32 %v1054, 1e-05
      %v1063 = vadd.f32 %v1055, 1e-05
      %v1064 = vrsqrt.pop %v1056
      %v1065 = vrsqrt.pop %v1057
      %v1066 = vrsqrt.pop %v1058
      %v1067 = vrsqrt.pop %v1059
      %v1068 = vrsqrt.pop %v1060
      %v1069 = vrsqrt.pop %v1061
      %v1070 = vrsqrt.pop %v1062
      %v1071 = vrsqrt.pop %v1063
      %v1072 = vmul.f32 %v976, %v1064
      %v1073 = vmul.f32 %v977, %v1065
      %v1074 = vmul.f32 %v978, %v1066
      %v1075 = vmul.f32 %v979, %v1067
      %v1076 = vmul.f32 %v980, %v1068
      %v1077 = vmul.f32 %v981, %v1069
      %v1078 = vmul.f32 %v982, %v1070
      %v1079 = vmul.f32 %v983, %v1071
      %1080 = vrot.lane.b32.xlu0 %v524, 96
      %v1081 = vpop.permute.xlu0 %1080
      %v1083 = vmul.f32 %v1072, %v1081
      %v1084 = vmul.f32 %v1073, %v1081
      %v1085 = vmul.f32 %v1074, %v1081
      %v1086 = vmul.f32 %v1075, %v1081
      %v1087 = vmul.f32 %v1076, %v1081
      %v1088 = vmul.f32 %v1077, %v1081
      %v1089 = vmul.f32 %v1078, %v1081
      %v1090 = vmul.f32 %v1079, %v1081
      %1091 = vrot.lane.b32.xlu0 %v538, 96
      %v1092 = vpop.permute.xlu0 %1091
      %v1094 = vadd.f32 %v1083, %v1092
      %v1095 = vadd.f32 %v1084, %v1092
      %v1096 = vadd.f32 %v1085, %v1092
      %v1097 = vadd.f32 %v1086, %v1092
      %v1098 = vadd.f32 %v1087, %v1092
      %v1099 = vadd.f32 %v1088, %v1092
      %v1100 = vadd.f32 %v1089, %v1092
      %v1101 = vadd.f32 %v1090, %v1092
      %v1102 = vsel %vm414, %v540, %v730
      %v1103 = vsel %vm414, %v541, %v731
      %v1104 = vsel %vm414, %v542, %v732
      %v1105 = vsel %vm414, %v543, %v733
      %v1106 = vsel %vm414, %v544, %v734
      %v1107 = vsel %vm414, %v545, %v735
      %v1108 = vsel %vm414, %v546, %v736
      %v1109 = vsel %vm414, %v547, %v737
      %v1110 = vsel %vm282, %v1102, %v912
      %v1111 = vsel %vm282, %v1103, %v913
      %v1112 = vsel %vm282, %v1104, %v914
      %v1113 = vsel %vm282, %v1105, %v915
      %v1114 = vsel %vm282, %v1106, %v916
      %v1115 = vsel %vm282, %v1107, %v917
      %v1116 = vsel %vm282, %v1108, %v918
      %v1117 = vsel %vm282, %v1109, %v919
      %vm1118 = vcmask 785408
      %v1119 = vsel %vm1118, %v1110, %v1094
      %v1120 = vsel %vm1118, %v1111, %v1095
      %v1121 = vsel %vm1118, %v1112, %v1096
      %v1122 = vsel %vm1118, %v1113, %v1097
      %v1123 = vsel %vm1118, %v1114, %v1098
      %v1124 = vsel %vm1118, %v1115, %v1099
      %v1125 = vsel %vm1118, %v1116, %v1100
      %v1126 = vsel %vm1118, %v1117, %v1101
      %v1127 = vcombine.low %v1119, %v1121
      %v1128 = vcombine.high %v1119, %v1121
      %v1130 = vunpack.c.l.s4 1983009808
      %v1131 = vunpack.c.0.s8 %v1130
      %v1132 = vlaneseq
      %v1133 = vshrl.u32 %v1132, 7
      %v1134 = vsub.s32 %v1131, %v1133
      %v1135 = vrot.slane %v1127, %v1134
      %v1137 = vunpack.c.l.s4 1983009808
      %v1138 = vunpack.c.0.s8 %v1137
      %v1139 = vlaneseq
      %v1140 = vshrl.u32 %v1139, 7
      %v1141 = vsub.s32 %v1138, %v1140
      %v1142 = vrot.slane %v1128, %v1141
      %v1143 = vcombine.low %v1120, %v1122
      %v1144 = vcombine.high %v1120, %v1122
      %v1146 = vunpack.c.l.s4 1983009808
      %v1147 = vunpack.c.0.s8 %v1146
      %v1148 = vlaneseq
      %v1149 = vshrl.u32 %v1148, 7
      %v1150 = vsub.s32 %v1147, %v1149
      %v1151 = vrot.slane %v1143, %v1150
      %v1153 = vunpack.c.l.s4 1983009808
      %v1154 = vunpack.c.0.s8 %v1153
      %v1155 = vlaneseq
      %v1156 = vshrl.u32 %v1155, 7
      %v1157 = vsub.s32 %v1154, %v1156
      %v1158 = vrot.slane %v1144, %v1157
      %v1159 = vcombine.low %v1123, %v1125
      %v1160 = vcombine.high %v1123, %v1125
      %v1162 = vunpack.c.l.s4 1983009808
      %v1163 = vunpack.c.0.s8 %v1162
      %v1164 = vlaneseq
      %v1165 = vshrl.u32 %v1164, 7
      %v1166 = vsub.s32 %v1163, %v1165
      %v1167 = vrot.slane %v1159, %v1166
      %v1169 = vunpack.c.l.s4 1983009808
      %v1170 = vunpack.c.0.s8 %v1169
      %v1171 = vlaneseq
      %v1172 = vshrl.u32 %v1171, 7
      %v1173 = vsub.s32 %v1170, %v1172
      %v1174 = vrot.slane %v1160, %v1173
      %v1175 = vcombine.low %v1124, %v1126
      %v1176 = vcombine.high %v1124, %v1126
      %v1178 = vunpack.c.l.s4 1983009808
      %v1179 = vunpack.c.0.s8 %v1178
      %v1180 = vlaneseq
      %v1181 = vshrl.u32 %v1180, 7
      %v1182 = vsub.s32 %v1179, %v1181
      %v1183 = vrot.slane %v1175, %v1182
      %v1185 = vunpack.c.l.s4 1983009808
      %v1186 = vunpack.c.0.s8 %v1185
      %v1187 = vlaneseq
      %v1188 = vshrl.u32 %v1187, 7
      %v1189 = vsub.s32 %v1186, %v1188
      %v1190 = vrot.slane %v1176, %v1189
      %v1191 = vcombine.low %v1135, %v1151
      %v1192 = vcombine.high %v1135, %v1151
      %v1194 = vunpack.c.l.s4 1934713408
      %v1195 = vunpack.c.0.s8 %v1194
      %v1196 = vlaneseq
      %v1197 = vshrl.u32 %v1196, 7
      %v1198 = vsub.s32 %v1195, %v1197
      %v1199 = vrot.slane %v1191, %v1198
      %v1201 = vunpack.c.l.s4 1934713408
      %v1202 = vunpack.c.0.s8 %v1201
      %v1203 = vlaneseq
      %v1204 = vshrl.u32 %v1203, 7
      %v1205 = vsub.s32 %v1202, %v1204
      %v1206 = vrot.slane %v1192, %v1205
      %v1207 = vcombine.low %v1142, %v1158
      %v1208 = vcombine.high %v1142, %v1158
      %v1210 = vunpack.c.l.s4 1934713408
      %v1211 = vunpack.c.0.s8 %v1210
      %v1212 = vlaneseq
      %v1213 = vshrl.u32 %v1212, 7
      %v1214 = vsub.s32 %v1211, %v1213
      %v1215 = vrot.slane %v1207, %v1214
      %v1217 = vunpack.c.l.s4 1934713408
      %v1218 = vunpack.c.0.s8 %v1217
      %v1219 = vlaneseq
      %v1220 = vshrl.u32 %v1219, 7
      %v1221 = vsub.s32 %v1218, %v1220
      %v1222 = vrot.slane %v1208, %v1221
      %v1223 = vcombine.low %v1167, %v1183
      %v1224 = vcombine.high %v1167, %v1183
      %v1226 = vunpack.c.l.s4 1934713408
      %v1227 = vunpack.c.0.s8 %v1226
      %v1228 = vlaneseq
      %v1229 = vshrl.u32 %v1228, 7
      %v1230 = vsub.s32 %v1227, %v1229
      %v1231 = vrot.slane %v1223, %v1230
      %v1233 = vunpack.c.l.s4 1934713408
      %v1234 = vunpack.c.0.s8 %v1233
      %v1235 = vlaneseq
      %v1236 = vshrl.u32 %v1235, 7
      %v1237 = vsub.s32 %v1234, %v1236
      %v1238 = vrot.slane %v1224, %v1237
      %v1239 = vcombine.low %v1174, %v1190
      %v1240 = vcombine.high %v1174, %v1190
      %v1242 = vunpack.c.l.s4 1934713408
      %v1243 = vunpack.c.0.s8 %v1242
      %v1244 = vlaneseq
      %v1245 = vshrl.u32 %v1244, 7
      %v1246 = vsub.s32 %v1243, %v1245
      %v1247 = vrot.slane %v1239, %v1246
      %v1249 = vunpack.c.l.s4 1934713408
      %v1250 = vunpack.c.0.s8 %v1249
      %v1251 = vlaneseq
      %v1252 = vshrl.u32 %v1251, 7
      %v1253 = vsub.s32 %v1250, %v1252
      %v1254 = vrot.slane %v1240, %v1253
      %v1255 = vcombine.low %v1199, %v1231
      %v1256 = vcombine.high %v1199, %v1231
      %v1257 = vcombine.low %v1206, %v1238
      %v1258 = vcombine.high %v1206, %v1238
      %v1259 = vcombine.low %v1215, %v1247
      %v1260 = vcombine.high %v1215, %v1247
      %v1261 = vcombine.low %v1222, %v1254
      %v1262 = vcombine.high %v1222, %v1254
      %1264 = vrot.lane.b32.xlu0 %v1256, 64
      %v1265 = vpop.permute.xlu0 %1264
      %1268 = vrot.lane.b32.xlu0 %v1258, 64
      %v1269 = vpop.permute.xlu0 %1268
      %1272 = vrot.lane.b32.xlu0 %v1260, 64
      %v1273 = vpop.permute.xlu0 %1272
      %1276 = vrot.lane.b32.xlu0 %v1262, 64
      %v1277 = vpop.permute.xlu0 %1276
      %v1279 = vsel %vm282, %v1255, %v1265
      %v1280 = vsel %vm282, %v1257, %v1269
      %v1281 = vsel %vm282, %v1259, %v1273
      %v1282 = vsel %vm282, %v1261, %v1277
      %1291 = vrot.lane.b32.xlu0 %v1119, 64
      %v1292 = vpop.permute.xlu0 %1291
      %1293 = vrot.lane.b32.xlu0 %v1120, 64
      %v1294 = vpop.permute.xlu0 %1293
      %1295 = vrot.lane.b32.xlu0 %v1121, 64
      %v1296 = vpop.permute.xlu0 %1295
      %1297 = vrot.lane.b32.xlu0 %v1122, 64
      %v1298 = vpop.permute.xlu0 %1297
      %1299 = vrot.lane.b32.xlu0 %v1123, 64
      %v1300 = vpop.permute.xlu0 %1299
      %1301 = vrot.lane.b32.xlu0 %v1124, 64
      %v1302 = vpop.permute.xlu0 %1301
      %1303 = vrot.lane.b32.xlu0 %v1125, 64
      %v1304 = vpop.permute.xlu0 %1303
      %1305 = vrot.lane.b32.xlu0 %v1126, 64
      %v1306 = vpop.permute.xlu0 %1305
      %v1315 = vcombine.low %v1292, %v1296
      %v1316 = vcombine.high %v1292, %v1296
      %v1318 = vunpack.c.l.s4 1983009808
      %v1319 = vunpack.c.0.s8 %v1318
      %v1320 = vlaneseq
      %v1321 = vshrl.u32 %v1320, 7
      %v1322 = vsub.s32 %v1319, %v1321
      %v1323 = vrot.slane %v1315, %v1322
      %v1325 = vunpack.c.l.s4 1983009808
      %v1326 = vunpack.c.0.s8 %v1325
      %v1327 = vlaneseq
      %v1328 = vshrl.u32 %v1327, 7
      %v1329 = vsub.s32 %v1326, %v1328
      %v1330 = vrot.slane %v1316, %v1329
      %v1331 = vcombine.low %v1294, %v1298
      %v1332 = vcombine.high %v1294, %v1298
      %v1334 = vunpack.c.l.s4 1983009808
      %v1335 = vunpack.c.0.s8 %v1334
      %v1336 = vlaneseq
      %v1337 = vshrl.u32 %v1336, 7
      %v1338 = vsub.s32 %v1335, %v1337
      %v1339 = vrot.slane %v1331, %v1338
      %v1341 = vunpack.c.l.s4 1983009808
      %v1342 = vunpack.c.0.s8 %v1341
      %v1343 = vlaneseq
      %v1344 = vshrl.u32 %v1343, 7
      %v1345 = vsub.s32 %v1342, %v1344
      %v1346 = vrot.slane %v1332, %v1345
      %v1347 = vcombine.low %v1300, %v1304
      %v1348 = vcombine.high %v1300, %v1304
      %v1350 = vunpack.c.l.s4 1983009808
      %v1351 = vunpack.c.0.s8 %v1350
      %v1352 = vlaneseq
      %v1353 = vshrl.u32 %v1352, 7
      %v1354 = vsub.s32 %v1351, %v1353
      %v1355 = vrot.slane %v1347, %v1354
      %v1357 = vunpack.c.l.s4 1983009808
      %v1358 = vunpack.c.0.s8 %v1357
      %v1359 = vlaneseq
      %v1360 = vshrl.u32 %v1359, 7
      %v1361 = vsub.s32 %v1358, %v1360
      %v1362 = vrot.slane %v1348, %v1361
      %v1363 = vcombine.low %v1302, %v1306
      %v1364 = vcombine.high %v1302, %v1306
      %v1366 = vunpack.c.l.s4 1983009808
      %v1367 = vunpack.c.0.s8 %v1366
      %v1368 = vlaneseq
      %v1369 = vshrl.u32 %v1368, 7
      %v1370 = vsub.s32 %v1367, %v1369
      %v1371 = vrot.slane %v1363, %v1370
      %v1373 = vunpack.c.l.s4 1983009808
      %v1374 = vunpack.c.0.s8 %v1373
      %v1375 = vlaneseq
      %v1376 = vshrl.u32 %v1375, 7
      %v1377 = vsub.s32 %v1374, %v1376
      %v1378 = vrot.slane %v1364, %v1377
      %v1379 = vcombine.low %v1323, %v1339
      %v1380 = vcombine.high %v1323, %v1339
      %v1382 = vunpack.c.l.s4 1934713408
      %v1383 = vunpack.c.0.s8 %v1382
      %v1384 = vlaneseq
      %v1385 = vshrl.u32 %v1384, 7
      %v1386 = vsub.s32 %v1383, %v1385
      %v1387 = vrot.slane %v1379, %v1386
      %v1389 = vunpack.c.l.s4 1934713408
      %v1390 = vunpack.c.0.s8 %v1389
      %v1391 = vlaneseq
      %v1392 = vshrl.u32 %v1391, 7
      %v1393 = vsub.s32 %v1390, %v1392
      %v1394 = vrot.slane %v1380, %v1393
      %v1395 = vcombine.low %v1330, %v1346
      %v1396 = vcombine.high %v1330, %v1346
      %v1398 = vunpack.c.l.s4 1934713408
      %v1399 = vunpack.c.0.s8 %v1398
      %v1400 = vlaneseq
      %v1401 = vshrl.u32 %v1400, 7
      %v1402 = vsub.s32 %v1399, %v1401
      %v1403 = vrot.slane %v1395, %v1402
      %v1405 = vunpack.c.l.s4 1934713408
      %v1406 = vunpack.c.0.s8 %v1405
      %v1407 = vlaneseq
      %v1408 = vshrl.u32 %v1407, 7
      %v1409 = vsub.s32 %v1406, %v1408
      %v1410 = vrot.slane %v1396, %v1409
      %v1411 = vcombine.low %v1355, %v1371
      %v1412 = vcombine.high %v1355, %v1371
      %v1414 = vunpack.c.l.s4 1934713408
      %v1415 = vunpack.c.0.s8 %v1414
      %v1416 = vlaneseq
      %v1417 = vshrl.u32 %v1416, 7
      %v1418 = vsub.s32 %v1415, %v1417
      %v1419 = vrot.slane %v1411, %v1418
      %v1421 = vunpack.c.l.s4 1934713408
      %v1422 = vunpack.c.0.s8 %v1421
      %v1423 = vlaneseq
      %v1424 = vshrl.u32 %v1423, 7
      %v1425 = vsub.s32 %v1422, %v1424
      %v1426 = vrot.slane %v1412, %v1425
      %v1427 = vcombine.low %v1362, %v1378
      %v1428 = vcombine.high %v1362, %v1378
      %v1430 = vunpack.c.l.s4 1934713408
      %v1431 = vunpack.c.0.s8 %v1430
      %v1432 = vlaneseq
      %v1433 = vshrl.u32 %v1432, 7
      %v1434 = vsub.s32 %v1431, %v1433
      %v1435 = vrot.slane %v1427, %v1434
      %v1437 = vunpack.c.l.s4 1934713408
      %v1438 = vunpack.c.0.s8 %v1437
      %v1439 = vlaneseq
      %v1440 = vshrl.u32 %v1439, 7
      %v1441 = vsub.s32 %v1438, %v1440
      %v1442 = vrot.slane %v1428, %v1441
      %v1443 = vcombine.low %v1387, %v1419
      %v1444 = vcombine.high %v1387, %v1419
      %v1445 = vcombine.low %v1394, %v1426
      %v1446 = vcombine.high %v1394, %v1426
      %v1447 = vcombine.low %v1403, %v1435
      %v1448 = vcombine.high %v1403, %v1435
      %v1449 = vcombine.low %v1410, %v1442
      %v1450 = vcombine.high %v1410, %v1442
      %1452 = vrot.lane.b32.xlu0 %v1444, 64
      %v1453 = vpop.permute.xlu0 %1452
      %1456 = vrot.lane.b32.xlu0 %v1446, 64
      %v1457 = vpop.permute.xlu0 %1456
      %1460 = vrot.lane.b32.xlu0 %v1448, 64
      %v1461 = vpop.permute.xlu0 %1460
      %1464 = vrot.lane.b32.xlu0 %v1450, 64
      %v1465 = vpop.permute.xlu0 %1464
      %v1467 = vsel %vm282, %v1443, %v1453
      %v1468 = vsel %vm282, %v1445, %v1457
      %v1469 = vsel %vm282, %v1447, %v1461
      %v1470 = vsel %vm282, %v1449, %v1465
      %v1479 = vcombine.low %v1279, %v1280
      %v1480 = vcombine.high %v1279, %v1280
      %v1481 = vcombine.low %v1281, %v1282
      %v1482 = vcombine.high %v1281, %v1282
      %v1483 = vcombine.low %v1467, %v1468
      %v1484 = vcombine.high %v1467, %v1468
      %v1485 = vcombine.low %v1469, %v1470
      %v1486 = vcombine.high %v1469, %v1470
      %v1488 = vunpack.c.l.s4 1966171168
      %v1489 = vunpack.c.0.s8 %v1488
      %v1490 = vlaneseq
      %v1491 = vshrl.u32 %v1490, 7
      %v1492 = vsub.s32 %v1489, %v1491
      %v1493 = vrot.slane %v1479, %v1492
      %v1495 = vunpack.c.l.s4 1966171168
      %v1496 = vunpack.c.0.s8 %v1495
      %v1497 = vlaneseq
      %v1498 = vshrl.u32 %v1497, 7
      %v1499 = vsub.s32 %v1496, %v1498
      %v1500 = vrot.slane %v1480, %v1499
      %v1502 = vunpack.c.l.s4 1966171168
      %v1503 = vunpack.c.0.s8 %v1502
      %v1504 = vlaneseq
      %v1505 = vshrl.u32 %v1504, 7
      %v1506 = vsub.s32 %v1503, %v1505
      %v1507 = vrot.slane %v1481, %v1506
      %v1509 = vunpack.c.l.s4 1966171168
      %v1510 = vunpack.c.0.s8 %v1509
      %v1511 = vlaneseq
      %v1512 = vshrl.u32 %v1511, 7
      %v1513 = vsub.s32 %v1510, %v1512
      %v1514 = vrot.slane %v1482, %v1513
      %v1516 = vunpack.c.l.s4 1966171168
      %v1517 = vunpack.c.0.s8 %v1516
      %v1518 = vlaneseq
      %v1519 = vshrl.u32 %v1518, 7
      %v1520 = vsub.s32 %v1517, %v1519
      %v1521 = vrot.slane %v1483, %v1520
      %v1523 = vunpack.c.l.s4 1966171168
      %v1524 = vunpack.c.0.s8 %v1523
      %v1525 = vlaneseq
      %v1526 = vshrl.u32 %v1525, 7
      %v1527 = vsub.s32 %v1524, %v1526
      %v1528 = vrot.slane %v1484, %v1527
      %v1530 = vunpack.c.l.s4 1966171168
      %v1531 = vunpack.c.0.s8 %v1530
      %v1532 = vlaneseq
      %v1533 = vshrl.u32 %v1532, 7
      %v1534 = vsub.s32 %v1531, %v1533
      %v1535 = vrot.slane %v1485, %v1534
      %v1537 = vunpack.c.l.s4 1966171168
      %v1538 = vunpack.c.0.s8 %v1537
      %v1539 = vlaneseq
      %v1540 = vshrl.u32 %v1539, 7
      %v1541 = vsub.s32 %v1538, %v1540
      %v1542 = vrot.slane %v1486, %v1541
      %v1543 = vcombine.low %v1493, %v1507
      %v1544 = vcombine.high %v1493, %v1507
      %v1545 = vcombine.low %v1500, %v1514
      %v1546 = vcombine.high %v1500, %v1514
      %v1547 = vcombine.low %v1521, %v1535
      %v1548 = vcombine.high %v1521, %v1535
      %v1549 = vcombine.low %v1528, %v1542
      %v1550 = vcombine.high %v1528, %v1542
      %v1552 = vunpack.c.l.s4 1966171168
      %v1553 = vunpack.c.0.s8 %v1552
      %v1554 = vlaneseq
      %v1555 = vshrl.u32 %v1554, 7
      %v1556 = vsub.s32 %v1553, %v1555
      %v1557 = vrot.slane %v1543, %v1556
      %v1559 = vunpack.c.l.s4 1966171168
      %v1560 = vunpack.c.0.s8 %v1559
      %v1561 = vlaneseq
      %v1562 = vshrl.u32 %v1561, 7
      %v1563 = vsub.s32 %v1560, %v1562
      %v1564 = vrot.slane %v1545, %v1563
      %v1566 = vunpack.c.l.s4 1966171168
      %v1567 = vunpack.c.0.s8 %v1566
      %v1568 = vlaneseq
      %v1569 = vshrl.u32 %v1568, 7
      %v1570 = vsub.s32 %v1567, %v1569
      %v1571 = vrot.slane %v1544, %v1570
      %v1573 = vunpack.c.l.s4 1966171168
      %v1574 = vunpack.c.0.s8 %v1573
      %v1575 = vlaneseq
      %v1576 = vshrl.u32 %v1575, 7
      %v1577 = vsub.s32 %v1574, %v1576
      %v1578 = vrot.slane %v1546, %v1577
      %v1580 = vunpack.c.l.s4 1966171168
      %v1581 = vunpack.c.0.s8 %v1580
      %v1582 = vlaneseq
      %v1583 = vshrl.u32 %v1582, 7
      %v1584 = vsub.s32 %v1581, %v1583
      %v1585 = vrot.slane %v1547, %v1584
      %v1587 = vunpack.c.l.s4 1966171168
      %v1588 = vunpack.c.0.s8 %v1587
      %v1589 = vlaneseq
      %v1590 = vshrl.u32 %v1589, 7
      %v1591 = vsub.s32 %v1588, %v1590
      %v1592 = vrot.slane %v1549, %v1591
      %v1594 = vunpack.c.l.s4 1966171168
      %v1595 = vunpack.c.0.s8 %v1594
      %v1596 = vlaneseq
      %v1597 = vshrl.u32 %v1596, 7
      %v1598 = vsub.s32 %v1595, %v1597
      %v1599 = vrot.slane %v1548, %v1598
      %v1601 = vunpack.c.l.s4 1966171168
      %v1602 = vunpack.c.0.s8 %v1601
      %v1603 = vlaneseq
      %v1604 = vshrl.u32 %v1603, 7
      %v1605 = vsub.s32 %v1602, %v1604
      %v1606 = vrot.slane %v1550, %v1605
      %v1607 = vcombine.low %v1557, %v1585
      %v1608 = vcombine.high %v1557, %v1585
      %v1609 = vcombine.low %v1564, %v1592
      %v1610 = vcombine.high %v1564, %v1592
      %v1611 = vcombine.low %v1571, %v1599
      %v1612 = vcombine.high %v1571, %v1599
      %v1613 = vcombine.low %v1578, %v1606
      %v1614 = vcombine.high %v1578, %v1606
      %v1624 = vunpack.c.l.s4 1935823168
      %v1625 = vunpack.c.0.s8 %v1624
      %v1626 = vlaneseq
      %v1627 = vshrl.u32 %v1626, 7
      %v1628 = vsub.s32 %v1625, %v1627
      %v1629 = vrot.slane %v1607, %v1628
      %v1631 = vunpack.c.l.s4 1935823168
      %v1632 = vunpack.c.0.s8 %v1631
      %v1633 = vlaneseq
      %v1634 = vshrl.u32 %v1633, 7
      %v1635 = vsub.s32 %v1632, %v1634
      %v1636 = vrot.slane %v1611, %v1635
      %v1638 = vunpack.c.l.s4 1935823168
      %v1639 = vunpack.c.0.s8 %v1638
      %v1640 = vlaneseq
      %v1641 = vshrl.u32 %v1640, 7
      %v1642 = vsub.s32 %v1639, %v1641
      %v1643 = vrot.slane %v1608, %v1642
      %v1645 = vunpack.c.l.s4 1935823168
      %v1646 = vunpack.c.0.s8 %v1645
      %v1647 = vlaneseq
      %v1648 = vshrl.u32 %v1647, 7
      %v1649 = vsub.s32 %v1646, %v1648
      %v1650 = vrot.slane %v1612, %v1649
      %v1652 = vunpack.c.l.s4 1935823168
      %v1653 = vunpack.c.0.s8 %v1652
      %v1654 = vlaneseq
      %v1655 = vshrl.u32 %v1654, 7
      %v1656 = vsub.s32 %v1653, %v1655
      %v1657 = vrot.slane %v1609, %v1656
      %v1659 = vunpack.c.l.s4 1935823168
      %v1660 = vunpack.c.0.s8 %v1659
      %v1661 = vlaneseq
      %v1662 = vshrl.u32 %v1661, 7
      %v1663 = vsub.s32 %v1660, %v1662
      %v1664 = vrot.slane %v1613, %v1663
      %v1666 = vunpack.c.l.s4 1935823168
      %v1667 = vunpack.c.0.s8 %v1666
      %v1668 = vlaneseq
      %v1669 = vshrl.u32 %v1668, 7
      %v1670 = vsub.s32 %v1667, %v1669
      %v1671 = vrot.slane %v1610, %v1670
      %v1673 = vunpack.c.l.s4 1935823168
      %v1674 = vunpack.c.0.s8 %v1673
      %v1675 = vlaneseq
      %v1676 = vshrl.u32 %v1675, 7
      %v1677 = vsub.s32 %v1674, %v1676
      %v1678 = vrot.slane %v1614, %v1677
      %v1687 = vcombine.low %v1629, %v1636
      %v1688 = vcombine.high %v1629, %v1636
      %v1689 = vcombine.low %v1643, %v1650
      %v1690 = vcombine.high %v1643, %v1650
      %v1692 = vunpack.c.l.s4 1983009808
      %v1693 = vunpack.c.0.s8 %v1692
      %v1694 = vlaneseq
      %v1695 = vshrl.u32 %v1694, 7
      %v1696 = vsub.s32 %v1693, %v1695
      %v1697 = vrot.slane %v1687, %v1696
      %v1699 = vunpack.c.l.s4 1983009808
      %v1700 = vunpack.c.0.s8 %v1699
      %v1701 = vlaneseq
      %v1702 = vshrl.u32 %v1701, 7
      %v1703 = vsub.s32 %v1700, %v1702
      %v1704 = vrot.slane %v1688, %v1703
      %v1706 = vunpack.c.l.s4 1983009808
      %v1707 = vunpack.c.0.s8 %v1706
      %v1708 = vlaneseq
      %v1709 = vshrl.u32 %v1708, 7
      %v1710 = vsub.s32 %v1707, %v1709
      %v1711 = vrot.slane %v1689, %v1710
      %v1713 = vunpack.c.l.s4 1983009808
      %v1714 = vunpack.c.0.s8 %v1713
      %v1715 = vlaneseq
      %v1716 = vshrl.u32 %v1715, 7
      %v1717 = vsub.s32 %v1714, %v1716
      %v1718 = vrot.slane %v1690, %v1717
      %v1719 = vcombine.low %v1697, %v1711
      %v1720 = vcombine.high %v1697, %v1711
      %v1721 = vcombine.low %v1704, %v1718
      %v1722 = vcombine.high %v1704, %v1718
      %v1723 = vcombine.low %v1657, %v1664
      %v1724 = vcombine.high %v1657, %v1664
      %v1725 = vcombine.low %v1671, %v1678
      %v1726 = vcombine.high %v1671, %v1678
      %v1728 = vunpack.c.l.s4 1983009808
      %v1729 = vunpack.c.0.s8 %v1728
      %v1730 = vlaneseq
      %v1731 = vshrl.u32 %v1730, 7
      %v1732 = vsub.s32 %v1729, %v1731
      %v1733 = vrot.slane %v1723, %v1732
      %v1735 = vunpack.c.l.s4 1983009808
      %v1736 = vunpack.c.0.s8 %v1735
      %v1737 = vlaneseq
      %v1738 = vshrl.u32 %v1737, 7
      %v1739 = vsub.s32 %v1736, %v1738
      %v1740 = vrot.slane %v1724, %v1739
      %v1742 = vunpack.c.l.s4 1983009808
      %v1743 = vunpack.c.0.s8 %v1742
      %v1744 = vlaneseq
      %v1745 = vshrl.u32 %v1744, 7
      %v1746 = vsub.s32 %v1743, %v1745
      %v1747 = vrot.slane %v1725, %v1746
      %v1749 = vunpack.c.l.s4 1983009808
      %v1750 = vunpack.c.0.s8 %v1749
      %v1751 = vlaneseq
      %v1752 = vshrl.u32 %v1751, 7
      %v1753 = vsub.s32 %v1750, %v1752
      %v1754 = vrot.slane %v1726, %v1753
      %v1755 = vcombine.low %v1733, %v1747
      %v1756 = vcombine.high %v1733, %v1747
      %v1757 = vcombine.low %v1740, %v1754
      %v1758 = vcombine.high %v1740, %v1754
      %1767 = vst [vmem:[%s232] sm:$0xff] %v1719
      %1768 = vst [vmem:[%s232 + $0x8] sm:$0xff] %v1720
      %1769 = vst [vmem:[%s232 + $0x10] sm:$0xff] %v1721
      %1770 = vst [vmem:[%s232 + $0x18] sm:$0xff] %v1722
      %1771 = vst [vmem:[%s232 + $0x20] sm:$0xff] %v1755
      %1772 = vst [vmem:[%s232 + $0x28] sm:$0xff] %v1756
      %1773 = vst [vmem:[%s232 + $0x30] sm:$0xff] %v1757
      %1774 = vst [vmem:[%s232 + $0x38] sm:$0xff] %v1758
      %s1775 = smul.u32 2, %s20
      %p1776 = scmp.lt.s32.totalorder %s19, 1
      %s1777 = scalar_select %p1776, %s19, 1
      %p1778 = scmp.lt.s32.totalorder %s1775, 1
      %s1779 = scalar_select %p1778, %s1775, 1
      %s1780 = smul.addr %s1779, 4
      %s1781 = smul.addr %s1777, 8
      %s1782 = sadd.s32 %s1780, %s1781
      %s1783 = smul.addr %s1782, 8
      %s1784 = scalar_lea.vmem %s4, %s1783
      // Predicated region
      $region37: #{_patch_expand_call.1} parent=35 // pred_check
        %p1785 = pneg %p138
      $region38: #{_patch_expand_call.1} parent=35 // pred_check_branch
        %1787 = sbr.rel (%p1785) target = $region40
      $region39: #{_patch_expand_call.1} parent=35 // pred_region
        %s1788 = smul.u32 2, %s20
      $region40: #{_patch_expand_call.1} parent=35 // pred_fallthru
        _
    $region36: #{_patch_expand_call.1} parent=5 // pred_fallthru
      _
    %p1789 = scmp.le.s32.totalorder 2, %s10
    // Predicated region
    $region41: #{_patch_expand_call.1} parent=5 // pred_check
      %p1790 = pneg %p1789
    $region42: #{_patch_expand_call.1} parent=5 // pred_check_branch
      %1792 = sbr.rel (%p1790) target = $region44
    $region43: #{_patch_expand_call.1} parent=5 // pred_region
      %s1793 = ssub.s32 %s10, 2
      // Predicated region
      $region45: #{_patch_expand_call.1} parent=43 // pred_check
        %p1794 = pneg %p144
      $region46: #{_patch_expand_call.1} parent=43 // pred_check_branch
        %1796 = sbr.rel (%p1794) target = $region48
      $region47: #{_patch_expand_call.1} parent=43 // pred_region
        %s1797 = smul.u32 2, %s22
        %p1798 = scmp.lt.s32.totalorder %s21, 1
        %s1799 = scalar_select %p1798, %s21, 1
        %p1800 = scmp.lt.s32.totalorder %s1797, 1
        %s1801 = scalar_select %p1800, %s1797, 1
        %s1802 = smul.addr %s1801, 4
        %s1803 = smul.addr %s1799, 8
        %s1804 = sadd.s32 %s1802, %s1803
        %s1805 = smul.addr %s1804, 8
        %s1806 = scalar_lea.vmem %s4, %s1805
      $region48: #{_patch_expand_call.1} parent=43 // pred_fallthru
        _
    $region44: #{_patch_expand_call.1} parent=5 // pred_fallthru
      _
  $region6: #{_patch_expand_call.1} parent=0 // loop_footer
    %s14 = sadd.s32 1, %s10
  $region7: #{_patch_expand_call.1} parent=0 // loop_footer_branch
    %9 = sbr.rel target = $region3
  $region8: #{_patch_expand_call.1} parent=0 // loop_exit
    _

</llo_original>
